<compile_context>
chip_gen: v7x
topology: tpu7x:2x2x1
jax: 0.10.0
libtpu: 0.0.40
codegen_flags: <defaults>
</compile_context>

<pallas_src>
import functools

import jax
import jax.numpy as jnp
from jax import lax
from jax.experimental import pallas as pl
from jax.experimental.pallas import tpu as pltpu


_MISH_LINEAR_CUTOFF = 20.0


def _fast_mish(x):
    """Mish(x) = x * tanh(softplus(x)) using one exp + one approx reciprocal."""
    x_safe = jnp.minimum(x, _MISH_LINEAR_CUTOFF)      # keep exp finite
    t = jnp.exp(x_safe)
    num = t * (t + 2.0)
    y = x * num * pl.reciprocal(num + 2.0, approx=True)
    # For large x, Mish(x) -> x; the select keeps the fast branch NaN-free.
    return jnp.where(x > _MISH_LINEAR_CUTOFF, x, y)


def _residual_mlp_kernel(n_blocks, *refs):
    # refs layout:
    #   x_ref,
    #   w_in_ref, b_in_ref,
    #   (w1, b1, w2, b2) * n_blocks,
    #   w_out_t_ref (out_dim, hidden), b_out_t_ref (out_dim, 1),
    #   o_ref (out_dim, TILE_B)   [lane-dense: batch on the lane axis]
    x_ref = refs[0]
    w_in_ref, b_in_ref = refs[1], refs[2]
    block_refs = refs[3:3 + 4 * n_blocks]
    w_out_t_ref = refs[3 + 4 * n_blocks]
    b_out_t_ref = refs[4 + 4 * n_blocks]
    o_ref = refs[5 + 4 * n_blocks]

    # module forward casts to float32 before every layer
    x = x_ref[...].astype(jnp.float32)

    # input projection: Linear(input_dim, hidden_dim)
    h = jnp.dot(x, w_in_ref[...], preferred_element_type=jnp.float32) + b_in_ref[...]

    # residual pre-activation blocks (dropout rate 0 -> identity; no norm)
    for blk in range(n_blocks):
        w1, b1, w2, b2 = block_refs[4 * blk: 4 * blk + 4]
        h_in = h
        a = _fast_mish(h)
        a = jnp.dot(a, w1[...], preferred_element_type=jnp.float32) + b1[...]
        a = _fast_mish(a)
        a = jnp.dot(a, w2[...], preferred_element_type=jnp.float32) + b2[...]
        h = a + h_in

    # output projection, computed transposed so stores are lane-dense:
    # (out_dim, hidden) x (TILE_B, hidden)^T -> (out_dim, TILE_B)
    out_t = lax.dot_general(
        w_out_t_ref[...], h,
        dimension_numbers=(((1,), (1,)), ((), ())),
        preferred_element_type=jnp.float32,
    ) + b_out_t_ref[...]
    o_ref[...] = out_t


def residual_mlp_forward(x, params, n_blocks, tile_b=1024):
    """params: dict with w_in, b_in, blocks=[(w1,b1,w2,b2)...], w_out, b_out."""
    batch, input_dim = x.shape
    hidden = params["w_in"].shape[1]
    out_dim = params["w_out"].shape[1]

    # Tile the batch: single full tile (padded to a sublane multiple) when the
    # batch is small, otherwise lane-aligned tiles so the transposed output
    # block divides the array cleanly.
    if batch <= tile_b:
        tb = max(8, ((batch + 7) // 8) * 8)
    else:
        assert tile_b % 128 == 0, "multi-tile TILE_B must be a multiple of 128"
        tb = tile_b
    padded = ((batch + tb - 1) // tb) * tb
    if padded != batch:
        x = jnp.pad(x, ((0, padded - batch), (0, 0)))
    num_tiles = padded // tb

    w_out_t = params["w_out"].T                     # (out_dim, hidden)
    b_out_t = params["b_out"].reshape(out_dim, 1)   # (out_dim, 1)

    flat_args = [x, params["w_in"], params["b_in"]]
    for (w1, b1, w2, b2) in params["blocks"]:
        flat_args += [w1, b1, w2, b2]
    flat_args += [w_out_t, b_out_t]

    # x streams; every weight/bias is a full-array block with a constant
    # index map, so it is fetched once and stays VMEM-resident across steps.
    in_specs = [pl.BlockSpec((tb, input_dim), lambda i: (i, 0))]
    in_specs += [pl.BlockSpec(a.shape, lambda i: (0, 0)) for a in flat_args[1:]]
    out_specs = pl.BlockSpec((out_dim, tb), lambda i: (0, i))

    n_param_elems = sum(int(a.size) for a in flat_args[1:])
    flops = 2 * padded * (input_dim * hidden
                          + n_blocks * 2 * hidden * hidden
                          + hidden * out_dim)
    transcendentals = 2 * n_blocks * 2 * padded * hidden  # exp + rcp per Mish elt
    bytes_accessed = 4 * (padded * input_dim + padded * out_dim + n_param_elems)

    kernel = functools.partial(_residual_mlp_kernel, n_blocks)

    out_t = pl.pallas_call(
        kernel,
        out_shape=jax.ShapeDtypeStruct((out_dim, padded), jnp.float32),
        grid=(num_tiles,),
        in_specs=in_specs,
        out_specs=out_specs,
        compiler_params=pltpu.CompilerParams(
            dimension_semantics=("parallel",),
        ),
        cost_estimate=pl.CostEstimate(
            flops=flops,
            transcendentals=transcendentals,
            bytes_accessed=bytes_accessed,
        ),
    )(*flat_args)

    # back to the module's (batch, out_dim) layout, dropping padded rows
    return out_t.T[:batch]


def init_params(key, input_dim, hidden_dim, output_dim, n_blocks):
    """Deterministic synthetic parameters, stored as (in, out) matrices."""
    def linear(k, fan_in, fan_out):
        kw, kb = jax.random.split(k)
        bound = 1.0 / jnp.sqrt(fan_in)
        w = jax.random.uniform(kw, (fan_in, fan_out), jnp.float32, -bound, bound)
        b = jax.random.uniform(kb, (1, fan_out), jnp.float32, -bound, bound)
        return w, b

    keys = jax.random.split(key, 2 + 2 * n_blocks)
    w_in, b_in = linear(keys[0], input_dim, hidden_dim)
    blocks = []
    for i in range(n_blocks):
        w1, b1 = linear(keys[1 + 2 * i], hidden_dim, hidden_dim)
        w2, b2 = linear(keys[2 + 2 * i], hidden_dim, hidden_dim)
        blocks.append((w1, b1, w2, b2))
    w_out, b_out = linear(keys[-1], hidden_dim, output_dim)
    return {"w_in": w_in, "b_in": b_in, "blocks": blocks,
            "w_out": w_out, "b_out": b_out}


def reference_forward(x, params):
    """Pure-JAX reference mirroring the PyTorch forward (eval semantics)."""
    def mish(v):
        return v * jnp.tanh(jax.nn.softplus(v))
    h = x.astype(jnp.float32) @ params["w_in"] + params["b_in"]
    for (w1, b1, w2, b2) in params["blocks"]:
        h_in = h
        a = mish(h) @ w1 + b1
        a = mish(a) @ w2 + b2
        h = a + h_in
    return h @ params["w_out"] + params["b_out"]


if __name__ == "__main__":
    # small shapes consistent with the module (num_hidden_layers must be even)
    batch = 256
    input_dim = 16
    hidden_dim = 32
    num_hidden_layers = 2
    output_dim = 1
    n_blocks = num_hidden_layers // 2

    key = jax.random.PRNGKey(0)
    kx, kp = jax.random.split(key)
    x = jax.random.normal(kx, (batch, input_dim), dtype=jnp.float32)
    params = init_params(kp, input_dim, hidden_dim, output_dim, n_blocks)

    # tile_b=128 -> 2 grid steps: exercises the pipelined/multi-tile path
    out = residual_mlp_forward(x, params, n_blocks, tile_b=128)
    out = jax.block_until_ready(out)

    ref = reference_forward(x, params)
    assert out.shape == (batch, output_dim)
    # tolerance accounts for the approx-reciprocal Mish (still ~1e-3 accurate)
    assert jnp.allclose(out, ref, atol=5e-3, rtol=5e-3), "mismatch vs reference"

    # also exercise the single-tile (whole-batch) path
    out1 = jax.block_until_ready(residual_mlp_forward(x, params, n_blocks))
    assert jnp.allclose(out1, ref, atol=5e-3, rtol=5e-3), "mismatch (single tile)"

    print("KERNEL_OK")
</pallas_src>

<mosaic_0001>
module attributes {stable_mosaic.version = 11 : i64} {
  func.func @_residual_mlp_kernel(%arg0: i32, %arg1: memref<128x16xf32, #tpu.memory_space<vmem>>, %arg2: memref<16x32xf32, #tpu.memory_space<vmem>>, %arg3: memref<1x32xf32, #tpu.memory_space<vmem>>, %arg4: memref<32x32xf32, #tpu.memory_space<vmem>>, %arg5: memref<1x32xf32, #tpu.memory_space<vmem>>, %arg6: memref<32x32xf32, #tpu.memory_space<vmem>>, %arg7: memref<1x32xf32, #tpu.memory_space<vmem>>, %arg8: memref<1x32xf32, #tpu.memory_space<vmem>>, %arg9: memref<1x1xf32, #tpu.memory_space<vmem>>, %arg10: memref<1x128xf32, #tpu.memory_space<vmem>>) attributes {dimension_semantics = [#tpu.dimension_semantics<parallel>], iteration_bounds = array<i64: 2>, scalar_prefetch = 0 : i64, scratch_operands = 0 : i64, tpu.core_type = #tpu.core_type<tc>, window_params = [{transform_indices = @transform_0, window_bounds = array<i64: 128, 16>}, {pipeline_mode = #tpu.pipeline_mode<synchronous>, transform_indices = @transform_1, window_bounds = array<i64: 16, 32>}, {pipeline_mode = #tpu.pipeline_mode<synchronous>, transform_indices = @transform_2, window_bounds = array<i64: 1, 32>}, {pipeline_mode = #tpu.pipeline_mode<synchronous>, transform_indices = @transform_3, window_bounds = array<i64: 32, 32>}, {pipeline_mode = #tpu.pipeline_mode<synchronous>, transform_indices = @transform_4, window_bounds = array<i64: 1, 32>}, {pipeline_mode = #tpu.pipeline_mode<synchronous>, transform_indices = @transform_5, window_bounds = array<i64: 32, 32>}, {pipeline_mode = #tpu.pipeline_mode<synchronous>, transform_indices = @transform_6, window_bounds = array<i64: 1, 32>}, {pipeline_mode = #tpu.pipeline_mode<synchronous>, transform_indices = @transform_7, window_bounds = array<i64: 1, 32>}, {pipeline_mode = #tpu.pipeline_mode<synchronous>, transform_indices = @transform_8, window_bounds = array<i64: 1, 1>}, {transform_indices = @transform_9, window_bounds = array<i64: 1, 128>}]} {
    %c0 = arith.constant 0 : index
    %c0_0 = arith.constant 0 : index
    %0 = vector.load %arg1[%c0, %c0_0] : memref<128x16xf32, #tpu.memory_space<vmem>>, vector<128x16xf32>
    %c0_1 = arith.constant 0 : index
    %c0_2 = arith.constant 0 : index
    %1 = vector.load %arg2[%c0_1, %c0_2] : memref<16x32xf32, #tpu.memory_space<vmem>>, vector<16x32xf32>
    %cst = arith.constant dense<0.000000e+00> : vector<128x32xf32>
    %2 = tpu.matmul %0, %1, %cst {dimension_numbers = #tpu.dot_dimension_numbers<[1], [0], [0], [1], [0, 0, 1, 1], [], []>} : vector<128x16xf32>, vector<16x32xf32>, vector<128x32xf32> -> vector<128x32xf32>
    %c0_3 = arith.constant 0 : index
    %c0_4 = arith.constant 0 : index
    %3 = vector.load %arg3[%c0_3, %c0_4] : memref<1x32xf32, #tpu.memory_space<vmem>>, vector<1x32xf32>
    %4 = vector.broadcast %3 : vector<1x32xf32> to vector<128x32xf32>
    %5 = arith.addf %2, %4 : vector<128x32xf32>
    %cst_5 = arith.constant 2.000000e+01 : f32
    %6 = vector.broadcast %cst_5 : f32 to vector<128x32xf32>
    %7 = arith.minimumf %5, %6 : vector<128x32xf32>
    %8 = math.exp %7 : vector<128x32xf32>
    %cst_6 = arith.constant 2.000000e+00 : f32
    %9 = vector.broadcast %cst_6 : f32 to vector<128x32xf32>
    %10 = arith.addf %8, %9 : vector<128x32xf32>
    %11 = arith.mulf %8, %10 : vector<128x32xf32>
    %12 = arith.mulf %5, %11 : vector<128x32xf32>
    %cst_7 = arith.constant 2.000000e+00 : f32
    %13 = vector.broadcast %cst_7 : f32 to vector<128x32xf32>
    %14 = arith.addf %11, %13 : vector<128x32xf32>
    %15 = tpu.reciprocal %14 {approx = true} : vector<128x32xf32> -> vector<128x32xf32>
    %16 = arith.mulf %12, %15 : vector<128x32xf32>
    %cst_8 = arith.constant 2.000000e+01 : f32
    %17 = vector.broadcast %cst_8 : f32 to vector<128x32xf32>
    %18 = arith.cmpf ogt, %5, %17 : vector<128x32xf32>
    %19 = arith.select %18, %5, %16 : vector<128x32xi1>, vector<128x32xf32>
    %c0_9 = arith.constant 0 : index
    %c0_10 = arith.constant 0 : index
    %20 = vector.load %arg4[%c0_9, %c0_10] : memref<32x32xf32, #tpu.memory_space<vmem>>, vector<32x32xf32>
    %cst_11 = arith.constant dense<0.000000e+00> : vector<128x32xf32>
    %21 = tpu.matmul %19, %20, %cst_11 {dimension_numbers = #tpu.dot_dimension_numbers<[1], [0], [0], [1], [0, 0, 1, 1], [], []>} : vector<128x32xf32>, vector<32x32xf32>, vector<128x32xf32> -> vector<128x32xf32>
    %c0_12 = arith.constant 0 : index
    %c0_13 = arith.constant 0 : index
    %22 = vector.load %arg5[%c0_12, %c0_13] : memref<1x32xf32, #tpu.memory_space<vmem>>, vector<1x32xf32>
    %23 = vector.broadcast %22 : vector<1x32xf32> to vector<128x32xf32>
    %24 = arith.addf %21, %23 : vector<128x32xf32>
    %cst_14 = arith.constant 2.000000e+01 : f32
    %25 = vector.broadcast %cst_14 : f32 to vector<128x32xf32>
    %26 = arith.minimumf %24, %25 : vector<128x32xf32>
    %27 = math.exp %26 : vector<128x32xf32>
    %cst_15 = arith.constant 2.000000e+00 : f32
    %28 = vector.broadcast %cst_15 : f32 to vector<128x32xf32>
    %29 = arith.addf %27, %28 : vector<128x32xf32>
    %30 = arith.mulf %27, %29 : vector<128x32xf32>
    %31 = arith.mulf %24, %30 : vector<128x32xf32>
    %cst_16 = arith.constant 2.000000e+00 : f32
    %32 = vector.broadcast %cst_16 : f32 to vector<128x32xf32>
    %33 = arith.addf %30, %32 : vector<128x32xf32>
    %34 = tpu.reciprocal %33 {approx = true} : vector<128x32xf32> -> vector<128x32xf32>
    %35 = arith.mulf %31, %34 : vector<128x32xf32>
    %cst_17 = arith.constant 2.000000e+01 : f32
    %36 = vector.broadcast %cst_17 : f32 to vector<128x32xf32>
    %37 = arith.cmpf ogt, %24, %36 : vector<128x32xf32>
    %38 = arith.select %37, %24, %35 : vector<128x32xi1>, vector<128x32xf32>
    %c0_18 = arith.constant 0 : index
    %c0_19 = arith.constant 0 : index
    %39 = vector.load %arg6[%c0_18, %c0_19] : memref<32x32xf32, #tpu.memory_space<vmem>>, vector<32x32xf32>
    %cst_20 = arith.constant dense<0.000000e+00> : vector<128x32xf32>
    %40 = tpu.matmul %38, %39, %cst_20 {dimension_numbers = #tpu.dot_dimension_numbers<[1], [0], [0], [1], [0, 0, 1, 1], [], []>} : vector<128x32xf32>, vector<32x32xf32>, vector<128x32xf32> -> vector<128x32xf32>
    %c0_21 = arith.constant 0 : index
    %c0_22 = arith.constant 0 : index
    %41 = vector.load %arg7[%c0_21, %c0_22] : memref<1x32xf32, #tpu.memory_space<vmem>>, vector<1x32xf32>
    %42 = vector.broadcast %41 : vector<1x32xf32> to vector<128x32xf32>
    %43 = arith.addf %40, %42 : vector<128x32xf32>
    %44 = arith.addf %43, %5 : vector<128x32xf32>
    %c0_23 = arith.constant 0 : index
    %c0_24 = arith.constant 0 : index
    %45 = vector.load %arg8[%c0_23, %c0_24] : memref<1x32xf32, #tpu.memory_space<vmem>>, vector<1x32xf32>
    %cst_25 = arith.constant dense<0.000000e+00> : vector<1x128xf32>
    %46 = tpu.matmul %45, %44, %cst_25 {dimension_numbers = #tpu.dot_dimension_numbers<[1], [1], [0], [0], [0, 0, 1, 0], [], []>} : vector<1x32xf32>, vector<128x32xf32>, vector<1x128xf32> -> vector<1x128xf32>
    %c0_26 = arith.constant 0 : index
    %c0_27 = arith.constant 0 : index
    %47 = vector.load %arg9[%c0_26, %c0_27] : memref<1x1xf32, #tpu.memory_space<vmem>>, vector<1x1xf32>
    %48 = vector.broadcast %47 : vector<1x1xf32> to vector<1x128xf32>
    %49 = arith.addf %46, %48 : vector<1x128xf32>
    %c0_28 = arith.constant 0 : index
    %c0_29 = arith.constant 0 : index
    %50 = vector.load %arg10[%c0_28, %c0_29] : memref<1x128xf32, #tpu.memory_space<vmem>>, vector<1x128xf32>
    tpu.vector_store %arg10[%c0_28, %c0_29], %49 {strides = array<i32>} : memref<1x128xf32, #tpu.memory_space<vmem>>, vector<1x128xf32>,
    return
  }
  func.func @transform_0(%arg0: i32) -> (i32, i32) {
    %c0_i32 = arith.constant 0 : i32
    %c0_i32_0 = arith.constant 0 : i32
    return %arg0, %c0_i32 : i32, i32
  }
  func.func @transform_1(%arg0: i32) -> (i32, i32) {
    %c0_i32 = arith.constant 0 : i32
    %c0_i32_0 = arith.constant 0 : i32
    %c0_i32_1 = arith.constant 0 : i32
    return %c0_i32, %c0_i32_0 : i32, i32
  }
  func.func @transform_2(%arg0: i32) -> (i32, i32) {
    %c0_i32 = arith.constant 0 : i32
    %c0_i32_0 = arith.constant 0 : i32
    %c0_i32_1 = arith.constant 0 : i32
    return %c0_i32, %c0_i32_0 : i32, i32
  }
  func.func @transform_3(%arg0: i32) -> (i32, i32) {
    %c0_i32 = arith.constant 0 : i32
    %c0_i32_0 = arith.constant 0 : i32
    %c0_i32_1 = arith.constant 0 : i32
    return %c0_i32, %c0_i32_0 : i32, i32
  }
  func.func @transform_4(%arg0: i32) -> (i32, i32) {
    %c0_i32 = arith.constant 0 : i32
    %c0_i32_0 = arith.constant 0 : i32
    %c0_i32_1 = arith.constant 0 : i32
    return %c0_i32, %c0_i32_0 : i32, i32
  }
  func.func @transform_5(%arg0: i32) -> (i32, i32) {
    %c0_i32 = arith.constant 0 : i32
    %c0_i32_0 = arith.constant 0 : i32
    %c0_i32_1 = arith.constant 0 : i32
    return %c0_i32, %c0_i32_0 : i32, i32
  }
  func.func @transform_6(%arg0: i32) -> (i32, i32) {
    %c0_i32 = arith.constant 0 : i32
    %c0_i32_0 = arith.constant 0 : i32
    %c0_i32_1 = arith.constant 0 : i32
    return %c0_i32, %c0_i32_0 : i32, i32
  }
  func.func @transform_7(%arg0: i32) -> (i32, i32) {
    %c0_i32 = arith.constant 0 : i32
    %c0_i32_0 = arith.constant 0 : i32
    %c0_i32_1 = arith.constant 0 : i32
    return %c0_i32, %c0_i32_0 : i32, i32
  }
  func.func @transform_8(%arg0: i32) -> (i32, i32) {
    %c0_i32 = arith.constant 0 : i32
    %c0_i32_0 = arith.constant 0 : i32
    %c0_i32_1 = arith.constant 0 : i32
    return %c0_i32, %c0_i32_0 : i32, i32
  }
  func.func @transform_9(%arg0: i32) -> (i32, i32) {
    %c0_i32 = arith.constant 0 : i32
    %c0_i32_0 = arith.constant 0 : i32
    return %c0_i32, %arg0 : i32, i32
  }
}

</mosaic_0001>

<llo_original>
// kernel: tpu_custom_call.1
$region0: #{tpu_custom_call.1}
  #allocation0 [shape = 'u32[]', space=smem, size = 0x4, offset = 0x4, fixed_abs, tag = 'smem constant byte address 0x4 - core index']
  #allocation1 [shape = 'u32[144,128]{1,0:T(1,128)}', space=vmem, size = 0x12000, scoped, tag = 'internal scratch']
  #allocation2 [shape = 'f32[1,1]{1,0:T(1,128)S(1)}', space=vmem, size = 0x200, scoped, tag = 'scoped memory for tpu_custom_call.1']
  %s0 = inlined_call_operand.vmem [shape: f32[256,16], index: 0, kind: input, shape index: {}]
  %s1 = inlined_call_operand.vmem [shape: f32[16,32], index: 1, kind: input, shape index: {}]
  %s2 = inlined_call_operand.vmem [shape: f32[1,32], index: 2, kind: input, shape index: {}]
  %s3 = inlined_call_operand.vmem [shape: f32[32,32], index: 3, kind: input, shape index: {}]
  %s4 = inlined_call_operand.vmem [shape: f32[1,32], index: 4, kind: input, shape index: {}]
  %s5 = inlined_call_operand.vmem [shape: f32[32,32], index: 5, kind: input, shape index: {}]
  %s6 = inlined_call_operand.vmem [shape: f32[1,32], index: 6, kind: input, shape index: {}]
  %s7 = inlined_call_operand.vmem [shape: f32[1,32], index: 7, kind: input, shape index: {}]
  %s8 = inlined_call_operand.<no memory space> [shape: f32[1,1], index: 8, kind: input, shape index: {}]
  %s9 = inlined_call_operand.hbm [shape: f32[1,256], index: 9, kind: output, shape index: {}]
  %s10 = sld [smem:[#allocation0]]
  $region69: #{tpu_custom_call.1} parent=0
    _
  %s12 = ssub.s32 1, %s10
  %s13 = scalar_select 0, %s12, %s10
  %v14 = vstv %s8
  %15 = vst [vmem:[#allocation2] sm:$0x1] %v14
  $region1: #{tpu_custom_call.1} parent=0
    #allocation3 [shape = 'u8[1024]{0}', space=vmem, size = 0x400, scoped, tag = 'output window, operand 0']
    #allocation4 [shape = 's32[2]{0}', space=sflag, size = 0x8, scoped, tag = 'scoped memory for tpu_custom_call.1']
    %16 = vsyncpa [#allocation4], 0
    %s17 = scalar_lea.sflag [#allocation4], 1
    %18 = vsyncpa %s17, 0
    loop: start=0, step=1, limit=4
    $region2: #{tpu_custom_call.1} parent=1 // loop_pre_header
      _
    $region3: #{tpu_custom_call.1} parent=1 // loop_header
      %s20 = sphi 0, %s24
      %p21 = scmp.ge.s32.totalorder %s20, 4
      %s30 = sphi 0, %s32
      %s33 = sphi 0, %s30
      %s34 = sphi 0, %s33
      %s50 = sphi 0, %s34
      %s54 = sphi 0, %s54
      %s56 = sphi 0, %s54
      %s57 = sphi 0, %s56
      %s71 = sphi 0, %s57
      %s75 = sphi 0, %s75
      %s77 = sphi 0, %s75
      %s78 = sphi 0, %s77
      %s92 = sphi 0, %s78
      %s96 = sphi 0, %s96
      %s98 = sphi 0, %s96
      %s99 = sphi 0, %s98
      %s113 = sphi 0, %s99
      %s117 = sphi 0, %s117
      %s119 = sphi 0, %s117
      %s120 = sphi 0, %s119
      %s134 = sphi 0, %s120
      %s138 = sphi 0, %s138
      %s140 = sphi 0, %s138
      %s141 = sphi 0, %s140
      %s155 = sphi 0, %s141
      %s159 = sphi 0, %s159
      %s161 = sphi 0, %s159
      %s162 = sphi 0, %s161
      %s176 = sphi 0, %s162
      %s180 = sphi 0, %s180
      %s182 = sphi 0, %s180
      %s183 = sphi 0, %s182
      %s197 = sphi 0, %s183
      %s201 = sphi 0, %s201
      %s203 = sphi 0, %s201
      %s204 = sphi 0, %s203
      %s218 = sphi 0, %s204
      %s224 = sphi 0, %s226
      %s227 = sphi 0, %s224
      %s228 = sphi 0, %s227
      %s244 = sphi 0, %s228
    $region4: #{tpu_custom_call.1} parent=1 // loop_header_branch
      %23 = sbr.rel (%p21) target = $region8
    $region5: #{tpu_custom_call.1} parent=1 // loop_body
      %s25 = ssub.s32 %s20, 1
      %s26 = ssub.s32 %s20, 2
      %s27 = sadd.s32 %s20, 1
      %s28 = ssub.s32 %s20, %s27
      %p29 = scmp.eq.s32.totalorder %s28, 0
      %s31 = sadd.s32 %s30, 1
      %s32 = scalar_select %p29, %s30, %s31
      %p35 = pneg %p29
      %p36 = scmp.eq.s32.totalorder %s20, 1
      %p37 = por %p35, %p36
      %p38 = scmp.ne.s32.totalorder %s30, %s33
      %p39 = scmp.eq.s32.totalorder %s20, 0
      %p40 = por %p38, %p39
      %p41 = scmp.ne.s32.totalorder %s30, %s33
      %p42 = scmp.eq.s32.totalorder %s25, 1
      %p43 = por %p41, %p42
      %p44 = scmp.ne.s32.totalorder %s33, %s34
      %p45 = scmp.eq.s32.totalorder %s25, 0
      %p46 = por %p44, %p45
      %p47 = scmp.ne.s32.totalorder %s33, %s34
      %p48 = scmp.eq.s32.totalorder %s26, 1
      %p49 = por %p47, %p48
      %p51 = scmp.ne.s32.totalorder %s34, %s50
      %p52 = scmp.eq.s32.totalorder %s26, 0
      %p53 = por %p51, %p52
      %s55 = sadd.s32 %s54, 1
      %p58 = scmp.eq.s32.totalorder %s20, 1
      %p59 = scmp.ne.s32.totalorder %s54, %s56
      %p60 = scmp.eq.s32.totalorder %s20, 0
      %p61 = por %p59, %p60
      %p62 = scmp.ne.s32.totalorder %s54, %s56
      %p63 = scmp.eq.s32.totalorder %s25, 1
      %p64 = por %p62, %p63
      %p65 = scmp.ne.s32.totalorder %s56, %s57
      %p66 = scmp.eq.s32.totalorder %s25, 0
      %p67 = por %p65, %p66
      %p68 = scmp.ne.s32.totalorder %s56, %s57
      %p69 = scmp.eq.s32.totalorder %s26, 1
      %p70 = por %p68, %p69
      %p72 = scmp.ne.s32.totalorder %s57, %s71
      %p73 = scmp.eq.s32.totalorder %s26, 0
      %p74 = por %p72, %p73
      %s76 = sadd.s32 %s75, 1
      %p79 = scmp.eq.s32.totalorder %s20, 1
      %p80 = scmp.ne.s32.totalorder %s75, %s77
      %p81 = scmp.eq.s32.totalorder %s20, 0
      %p82 = por %p80, %p81
      %p83 = scmp.ne.s32.totalorder %s75, %s77
      %p84 = scmp.eq.s32.totalorder %s25, 1
      %p85 = por %p83, %p84
      %p86 = scmp.ne.s32.totalorder %s77, %s78
      %p87 = scmp.eq.s32.totalorder %s25, 0
      %p88 = por %p86, %p87
      %p89 = scmp.ne.s32.totalorder %s77, %s78
      %p90 = scmp.eq.s32.totalorder %s26, 1
      %p91 = por %p89, %p90
      %p93 = scmp.ne.s32.totalorder %s78, %s92
      %p94 = scmp.eq.s32.totalorder %s26, 0
      %p95 = por %p93, %p94
      %s97 = sadd.s32 %s96, 1
      %p100 = scmp.eq.s32.totalorder %s20, 1
      %p101 = scmp.ne.s32.totalorder %s96, %s98
      %p102 = scmp.eq.s32.totalorder %s20, 0
      %p103 = por %p101, %p102
      %p104 = scmp.ne.s32.totalorder %s96, %s98
      %p105 = scmp.eq.s32.totalorder %s25, 1
      %p106 = por %p104, %p105
      %p107 = scmp.ne.s32.totalorder %s98, %s99
      %p108 = scmp.eq.s32.totalorder %s25, 0
      %p109 = por %p107, %p108
      %p110 = scmp.ne.s32.totalorder %s98, %s99
      %p111 = scmp.eq.s32.totalorder %s26, 1
      %p112 = por %p110, %p111
      %p114 = scmp.ne.s32.totalorder %s99, %s113
      %p115 = scmp.eq.s32.totalorder %s26, 0
      %p116 = por %p114, %p115
      %s118 = sadd.s32 %s117, 1
      %p121 = scmp.eq.s32.totalorder %s20, 1
      %p122 = scmp.ne.s32.totalorder %s117, %s119
      %p123 = scmp.eq.s32.totalorder %s20, 0
      %p124 = por %p122, %p123
      %p125 = scmp.ne.s32.totalorder %s117, %s119
      %p126 = scmp.eq.s32.totalorder %s25, 1
      %p127 = por %p125, %p126
      %p128 = scmp.ne.s32.totalorder %s119, %s120
      %p129 = scmp.eq.s32.totalorder %s25, 0
      %p130 = por %p128, %p129
      %p131 = scmp.ne.s32.totalorder %s119, %s120
      %p132 = scmp.eq.s32.totalorder %s26, 1
      %p133 = por %p131, %p132
      %p135 = scmp.ne.s32.totalorder %s120, %s134
      %p136 = scmp.eq.s32.totalorder %s26, 0
      %p137 = por %p135, %p136
      %s139 = sadd.s32 %s138, 1
      %p142 = scmp.eq.s32.totalorder %s20, 1
      %p143 = scmp.ne.s32.totalorder %s138, %s140
      %p144 = scmp.eq.s32.totalorder %s20, 0
      %p145 = por %p143, %p144
      %p146 = scmp.ne.s32.totalorder %s138, %s140
      %p147 = scmp.eq.s32.totalorder %s25, 1
      %p148 = por %p146, %p147
      %p149 = scmp.ne.s32.totalorder %s140, %s141
      %p150 = scmp.eq.s32.totalorder %s25, 0
      %p151 = por %p149, %p150
      %p152 = scmp.ne.s32.totalorder %s140, %s141
      %p153 = scmp.eq.s32.totalorder %s26, 1
      %p154 = por %p152, %p153
      %p156 = scmp.ne.s32.totalorder %s141, %s155
      %p157 = scmp.eq.s32.totalorder %s26, 0
      %p158 = por %p156, %p157
      %s160 = sadd.s32 %s159, 1
      %p163 = scmp.eq.s32.totalorder %s20, 1
      %p164 = scmp.ne.s32.totalorder %s159, %s161
      %p165 = scmp.eq.s32.totalorder %s20, 0
      %p166 = por %p164, %p165
      %p167 = scmp.ne.s32.totalorder %s159, %s161
      %p168 = scmp.eq.s32.totalorder %s25, 1
      %p169 = por %p167, %p168
      %p170 = scmp.ne.s32.totalorder %s161, %s162
      %p171 = scmp.eq.s32.totalorder %s25, 0
      %p172 = por %p170, %p171
      %p173 = scmp.ne.s32.totalorder %s161, %s162
      %p174 = scmp.eq.s32.totalorder %s26, 1
      %p175 = por %p173, %p174
      %p177 = scmp.ne.s32.totalorder %s162, %s176
      %p178 = scmp.eq.s32.totalorder %s26, 0
      %p179 = por %p177, %p178
      %s181 = sadd.s32 %s180, 1
      %p184 = scmp.eq.s32.totalorder %s20, 1
      %p185 = scmp.ne.s32.totalorder %s180, %s182
      %p186 = scmp.eq.s32.totalorder %s20, 0
      %p187 = por %p185, %p186
      %p188 = scmp.ne.s32.totalorder %s180, %s182
      %p189 = scmp.eq.s32.totalorder %s25, 1
      %p190 = por %p188, %p189
      %p191 = scmp.ne.s32.totalorder %s182, %s183
      %p192 = scmp.eq.s32.totalorder %s25, 0
      %p193 = por %p191, %p192
      %p194 = scmp.ne.s32.totalorder %s182, %s183
      %p195 = scmp.eq.s32.totalorder %s26, 1
      %p196 = por %p194, %p195
      %p198 = scmp.ne.s32.totalorder %s183, %s197
      %p199 = scmp.eq.s32.totalorder %s26, 0
      %p200 = por %p198, %p199
      %s202 = sadd.s32 %s201, 1
      %p205 = scmp.eq.s32.totalorder %s20, 1
      %p206 = scmp.ne.s32.totalorder %s201, %s203
      %p207 = scmp.eq.s32.totalorder %s20, 0
      %p208 = por %p206, %p207
      %p209 = scmp.ne.s32.totalorder %s201, %s203
      %p210 = scmp.eq.s32.totalorder %s25, 1
      %p211 = por %p209, %p210
      %p212 = scmp.ne.s32.totalorder %s203, %s204
      %p213 = scmp.eq.s32.totalorder %s25, 0
      %p214 = por %p212, %p213
      %p215 = scmp.ne.s32.totalorder %s203, %s204
      %p216 = scmp.eq.s32.totalorder %s26, 1
      %p217 = por %p215, %p216
      %p219 = scmp.ne.s32.totalorder %s204, %s218
      %p220 = scmp.eq.s32.totalorder %s26, 0
      %p221 = por %p219, %p220
      %s222 = ssub.s32 %s20, %s27
      %p223 = scmp.eq.s32.totalorder %s222, 0
      %s225 = sadd.s32 %s224, 1
      %s226 = scalar_select %p223, %s224, %s225
      %p229 = pneg %p223
      %p230 = scmp.eq.s32.totalorder %s20, 1
      %p231 = por %p229, %p230
      %p232 = scmp.ne.s32.totalorder %s224, %s227
      %p233 = scmp.eq.s32.totalorder %s20, 0
      %p234 = por %p232, %p233
      %p235 = scmp.ne.s32.totalorder %s224, %s227
      %p236 = scmp.eq.s32.totalorder %s25, 1
      %p237 = por %p235, %p236
      %p238 = scmp.ne.s32.totalorder %s227, %s228
      %p239 = scmp.eq.s32.totalorder %s25, 0
      %p240 = por %p238, %p239
      %p241 = scmp.ne.s32.totalorder %s227, %s228
      %p242 = scmp.eq.s32.totalorder %s26, 1
      %p243 = por %p241, %p242
      %p245 = scmp.ne.s32.totalorder %s228, %s244
      %p246 = scmp.eq.s32.totalorder %s26, 0
      %p247 = por %p245, %p246
      %p248 = scmp.le.s32.totalorder 1, %s20
      %p249 = scmp.lt.s32.totalorder %s20, 3
      %p250 = pnand %p248, %p249
      %p251 = pneg %p250
      // Predicated region
      $region9: #{tpu_custom_call.1} parent=5 // pred_check
        _
      $region10: #{tpu_custom_call.1} parent=5 // pred_check_branch
        %253 = sbr.rel (%p250) target = $region12
      $region11: #{tpu_custom_call.1} parent=5 // pred_region
        %s254 = ssub.s32 %s20, 1
        // Predicated region
        $region13: #{tpu_custom_call.1} parent=11 // pred_check
          %p255 = pneg %p67
        $region14: #{tpu_custom_call.1} parent=11 // pred_check_branch
          %257 = sbr.rel (%p255) target = $region16
        $region15: #{tpu_custom_call.1} parent=11 // pred_region
          _
        $region16: #{tpu_custom_call.1} parent=11 // pred_fallthru
          _
        // Predicated region
        $region17: #{tpu_custom_call.1} parent=11 // pred_check
          %p258 = pneg %p88
        $region18: #{tpu_custom_call.1} parent=11 // pred_check_branch
          %260 = sbr.rel (%p258) target = $region20
        $region19: #{tpu_custom_call.1} parent=11 // pred_region
          _
        $region20: #{tpu_custom_call.1} parent=11 // pred_fallthru
          _
        // Predicated region
        $region21: #{tpu_custom_call.1} parent=11 // pred_check
          %p261 = pneg %p109
        $region22: #{tpu_custom_call.1} parent=11 // pred_check_branch
          %263 = sbr.rel (%p261) target = $region24
        $region23: #{tpu_custom_call.1} parent=11 // pred_region
          _
        $region24: #{tpu_custom_call.1} parent=11 // pred_fallthru
          _
        // Predicated region
        $region25: #{tpu_custom_call.1} parent=11 // pred_check
          %p264 = pneg %p130
        $region26: #{tpu_custom_call.1} parent=11 // pred_check_branch
          %266 = sbr.rel (%p264) target = $region28
        $region27: #{tpu_custom_call.1} parent=11 // pred_region
          _
        $region28: #{tpu_custom_call.1} parent=11 // pred_fallthru
          _
        // Predicated region
        $region29: #{tpu_custom_call.1} parent=11 // pred_check
          %p267 = pneg %p151
        $region30: #{tpu_custom_call.1} parent=11 // pred_check_branch
          %269 = sbr.rel (%p267) target = $region32
        $region31: #{tpu_custom_call.1} parent=11 // pred_region
          _
        $region32: #{tpu_custom_call.1} parent=11 // pred_fallthru
          _
        // Predicated region
        $region33: #{tpu_custom_call.1} parent=11 // pred_check
          %p270 = pneg %p172
        $region34: #{tpu_custom_call.1} parent=11 // pred_check_branch
          %272 = sbr.rel (%p270) target = $region36
        $region35: #{tpu_custom_call.1} parent=11 // pred_region
          _
        $region36: #{tpu_custom_call.1} parent=11 // pred_fallthru
          _
        // Predicated region
        $region37: #{tpu_custom_call.1} parent=11 // pred_check
          %p273 = pneg %p193
        $region38: #{tpu_custom_call.1} parent=11 // pred_check_branch
          %275 = sbr.rel (%p273) target = $region40
        $region39: #{tpu_custom_call.1} parent=11 // pred_region
          _
        $region40: #{tpu_custom_call.1} parent=11 // pred_fallthru
          _
        // Predicated region
        $region41: #{tpu_custom_call.1} parent=11 // pred_check
          %p276 = pneg %p214
        $region42: #{tpu_custom_call.1} parent=11 // pred_check_branch
          %278 = sbr.rel (%p276) target = $region44
        $region43: #{tpu_custom_call.1} parent=11 // pred_region
          _
        $region44: #{tpu_custom_call.1} parent=11 // pred_fallthru
          _
      $region12: #{tpu_custom_call.1} parent=5 // pred_fallthru
        _
      %p279 = scmp.lt.s32.totalorder %s20, 2
      // Predicated region
      $region45: #{tpu_custom_call.1} parent=5 // pred_check
        %p280 = pneg %p279
      $region46: #{tpu_custom_call.1} parent=5 // pred_check_branch
        %282 = sbr.rel (%p280) target = $region48
      $region47: #{tpu_custom_call.1} parent=5 // pred_region
        // Predicated region
        $region49: #{tpu_custom_call.1} parent=47 // pred_check
          %p283 = pneg %p40
        $region50: #{tpu_custom_call.1} parent=47 // pred_check_branch
          %285 = sbr.rel (%p283) target = $region52
        $region51: #{tpu_custom_call.1} parent=47 // pred_region
          %s286 = smul.u32 16, %s20
          %p287 = scmp.lt.s32.totalorder %s286, 31
          %s288 = scalar_select %p287, %s286, 31
          %s289 = smul.addr %s288, 8
          %s290 = scalar_lea.vmem %s0, %s289
          %s291 = smul.u32 16, %s20
        $region52: #{tpu_custom_call.1} parent=47 // pred_fallthru
          _
      $region48: #{tpu_custom_call.1} parent=5 // pred_fallthru
        _
      %p292 = scmp.le.s32.totalorder 1, %s20
      %p293 = scmp.lt.s32.totalorder %s20, 3
      %p294 = pnand %p292, %p293
      %p295 = pneg %p294
      // Predicated region
      $region53: #{tpu_custom_call.1} parent=5 // pred_check
        _
      $region54: #{tpu_custom_call.1} parent=5 // pred_check_branch
        %297 = sbr.rel (%p294) target = $region56
      $region55: #{tpu_custom_call.1} parent=5 // pred_region
        %s298 = ssub.s32 %s20, 1
        %s299 = smul.u32 16, %s25
        %p300 = scmp.lt.s32.totalorder %s299, 31
        %s301 = scalar_select %p300, %s299, 31
        %s302 = smul.addr %s301, 8
        %s303 = scalar_lea.vmem %s0, %s302
        %p304 = pneg %p46
        %p305 = pneg %p43
        %p306 = pneg %p67
        %p307 = pneg %p64
        %p308 = pneg %p88
        %p309 = pneg %p85
        %p310 = pneg %p109
        %p311 = pneg %p106
        %p312 = pneg %p130
        %p313 = pneg %p127
        %p314 = pneg %p151
        %p315 = pneg %p148
        %p316 = pneg %p172
        %p317 = pneg %p169
        %p318 = pneg %p193
        %p319 = pneg %p190
        %p320 = pneg %p214
        %p321 = pneg %p211
        %p322 = pneg %p240
        %p323 = pneg %p237
        %s324 = sand.u32 %s227, 1
        %s325 = scalar_lea.sflag [#allocation4], %s324
        %s326 = sand.u32 %s227, 1
        %s327 = scalar_lea.vmem [#allocation3], %s326
        %s328 = smul.u32 16, %s25
        %p329 = scmp.lt.s32.totalorder %s328, 31
        %s330 = scalar_select %p329, %s328, 31
        %s331 = smul.addr %s330, 8
        %s332 = scalar_lea.vmem %s0, %s331
        %s333 = smul.u32 16, %s25
        %v334 = vld [vmem:[%s332] sm:$0xff]
        %v335 = vld [vmem:[%s332 + $0x8] sm:$0xff]
        %v336 = vld [vmem:[%s332 + $0x10] sm:$0xff]
        %v337 = vld [vmem:[%s332 + $0x18] sm:$0xff]
        %v338 = vld [vmem:[%s332 + $0x20] sm:$0xff]
        %v339 = vld [vmem:[%s332 + $0x28] sm:$0xff]
        %v340 = vld [vmem:[%s332 + $0x30] sm:$0xff]
        %v341 = vld [vmem:[%s332 + $0x38] sm:$0xff]
        %v342 = vld [vmem:[%s332 + $0x40] sm:$0xff]
        %v343 = vld [vmem:[%s332 + $0x48] sm:$0xff]
        %v344 = vld [vmem:[%s332 + $0x50] sm:$0xff]
        %v345 = vld [vmem:[%s332 + $0x58] sm:$0xff]
        %v346 = vld [vmem:[%s332 + $0x60] sm:$0xff]
        %v347 = vld [vmem:[%s332 + $0x68] sm:$0xff]
        %v348 = vld [vmem:[%s332 + $0x70] sm:$0xff]
        %v349 = vld [vmem:[%s332 + $0x78] sm:$0xff]
        %v350 = vld [vmem:[%s1] sm:$0xff]
        %v351 = vld [vmem:[%s1 + $0x8] sm:$0xff]
        %v352 = vld [vmem:[%s2] sm:$0x1]
        %v354 = vlaneseq
        %v355 = vshrl.u32 %v354, 7
        %v356 = vsub.s32 0, %v355
        %v357 = vrot.slane %v352, %v356
        %vm359 = vcmask 130048
        %v361 = vsel %vm359, %v334, 0
        %v364 = vsel %vm359, %v335, 0
        %v367 = vsel %vm359, %v336, 0
        %v370 = vsel %vm359, %v337, 0
        %v373 = vsel %vm359, %v338, 0
        %v376 = vsel %vm359, %v339, 0
        %v379 = vsel %vm359, %v340, 0
        %v382 = vsel %vm359, %v341, 0
        %v385 = vsel %vm359, %v342, 0
        %v388 = vsel %vm359, %v343, 0
        %v391 = vsel %vm359, %v344, 0
        %v394 = vsel %vm359, %v345, 0
        %v397 = vsel %vm359, %v346, 0
        %v400 = vsel %vm359, %v347, 0
        %v403 = vsel %vm359, %v348, 0
        %v406 = vsel %vm359, %v349, 0
        %408 = vmatprep.subr.mxu0 0.0
        %409 = vmatpush1.msra.mxu0 %v350
        %410 = vmatprep.subr.mxu0 0.0
        %411 = vmatpush1.msra.mxu0 %v351
        %412 = vmatprep.subr.mxu0 0.0
        %413 = vmatpush1.msra.mxu0 0.0
        %414 = vmatprep.subr.mxu0 0.0
        %415 = vmatpush1.msra.mxu0 0.0
        %416 = vmatprep.subr.mxu0 0.0
        %417 = vmatpush1.msra.mxu0 0.0
        %418 = vmatprep.subr.mxu0 0.0
        %419 = vmatpush1.msra.mxu0 0.0
        %420 = vmatprep.subr.mxu0 0.0
        %421 = vmatpush1.msra.mxu0 0.0
        %422 = vmatprep.subr.mxu0 0.0
        %423 = vmatpush1.msra.mxu0 0.0
        %424 = vmatprep.subr.mxu0 0.0
        %425 = vmatpush1.msra.mxu0 0.0
        %426 = vmatprep.subr.mxu0 0.0
        %427 = vmatpush1.msra.mxu0 0.0
        %428 = vmatprep.subr.mxu0 0.0
        %429 = vmatpush1.msra.mxu0 0.0
        %430 = vmatprep.subr.mxu0 0.0
        %431 = vmatpush1.msra.mxu0 0.0
        %432 = vmatprep.subr.mxu0 0.0
        %433 = vmatpush1.msra.mxu0 0.0
        %434 = vmatprep.subr.mxu0 0.0
        %435 = vmatpush1.msra.mxu0 0.0
        %436 = vmatprep.subr.mxu0 0.0
        %437 = vmatpush1.msra.mxu0 0.0
        %438 = vmatprep.subr.mxu0 0.0
        %439 = vmatpush1.msra.mxu0 0.0
        %440 = vmatprep.subr.mxu0 0.0
        %441 = vmatpush1.msra.mxu0 0.0
        %442 = vmatprep.subr.mxu0 0.0
        %443 = vmatpush1.msra.mxu0 0.0
        %444 = vmatprep.subr.mxu0 0.0
        %445 = vmatpush1.msra.mxu0 0.0
        %446 = vmatprep.subr.mxu0 0.0
        %447 = vmatpush1.msra.mxu0 0.0
        %448 = vmatprep.subr.mxu0 0.0
        %449 = vmatpush1.msra.mxu0 0.0
        %450 = vmatprep.subr.mxu0 0.0
        %451 = vmatpush1.msra.mxu0 0.0
        %452 = vmatprep.subr.mxu0 0.0
        %453 = vmatpush1.msra.mxu0 0.0
        %454 = vmatprep.subr.mxu0 0.0
        %455 = vmatpush1.msra.mxu0 0.0
        %456 = vmatprep.subr.mxu0 0.0
        %457 = vmatpush1.msra.mxu0 0.0
        %458 = vmatprep.subr.mxu0 0.0
        %459 = vmatpush1.msra.mxu0 0.0
        %460 = vmatprep.subr.mxu0 0.0
        %461 = vmatpush1.msra.mxu0 0.0
        %462 = vmatprep.subr.mxu0 0.0
        %463 = vmatpush1.msra.mxu0 0.0
        %464 = vmatprep.subr.mxu0 0.0
        %465 = vmatpush1.msra.mxu0 0.0
        %466 = vmatprep.subr.mxu0 0.0
        %467 = vmatpush1.msra.mxu0 0.0
        %468 = vmatprep.subr.mxu0 0.0
        %469 = vmatpush1.msra.mxu0 0.0
        %470 = vmatprep.subr.mxu0 0.0
        %471 = vmatpush1.msra.mxu0 0.0
        %472 = vmatprep.mubr.f32.mxu0 0.0
        %473 = vmatmul.mubr.f32.gmra.mrb[0].mxu0 %v361
        %v474 = vpop.f32.mrb[0].mxu0
        %v475 = vadd.f32 %v357, %v474
        %v476 = vpop.f32.mrb[0].mxu0
        %477 = vmatprep.mubr.f32.mxu0 0.0
        %478 = vmatmul.mubr.f32.gmra.mrb[0].mxu0 %v364
        %v479 = vpop.f32.mrb[0].mxu0
        %v480 = vadd.f32 %v357, %v479
        %v481 = vpop.f32.mrb[0].mxu0
        %482 = vmatprep.mubr.f32.mxu0 0.0
        %483 = vmatmul.mubr.f32.gmra.mrb[0].mxu0 %v367
        %v484 = vpop.f32.mrb[0].mxu0
        %v485 = vadd.f32 %v357, %v484
        %v486 = vpop.f32.mrb[0].mxu0
        %487 = vmatprep.mubr.f32.mxu0 0.0
        %488 = vmatmul.mubr.f32.gmra.mrb[0].mxu0 %v370
        %v489 = vpop.f32.mrb[0].mxu0
        %v490 = vadd.f32 %v357, %v489
        %v491 = vpop.f32.mrb[0].mxu0
        %492 = vmatprep.mubr.f32.mxu0 0.0
        %493 = vmatmul.mubr.f32.gmra.mrb[0].mxu0 %v373
        %v494 = vpop.f32.mrb[0].mxu0
        %v495 = vadd.f32 %v357, %v494
        %v496 = vpop.f32.mrb[0].mxu0
        %497 = vmatprep.mubr.f32.mxu0 0.0
        %498 = vmatmul.mubr.f32.gmra.mrb[0].mxu0 %v376
        %v499 = vpop.f32.mrb[0].mxu0
        %v500 = vadd.f32 %v357, %v499
        %v501 = vpop.f32.mrb[0].mxu0
        %502 = vmatprep.mubr.f32.mxu0 0.0
        %503 = vmatmul.mubr.f32.gmra.mrb[0].mxu0 %v379
        %v504 = vpop.f32.mrb[0].mxu0
        %v505 = vadd.f32 %v357, %v504
        %v506 = vpop.f32.mrb[0].mxu0
        %507 = vmatprep.mubr.f32.mxu0 0.0
        %508 = vmatmul.mubr.f32.gmra.mrb[0].mxu0 %v382
        %v509 = vpop.f32.mrb[0].mxu0
        %v510 = vadd.f32 %v357, %v509
        %v511 = vpop.f32.mrb[0].mxu0
        %512 = vmatprep.mubr.f32.mxu0 0.0
        %513 = vmatmul.mubr.f32.gmra.mrb[0].mxu0 %v385
        %v514 = vpop.f32.mrb[0].mxu0
        %v515 = vadd.f32 %v357, %v514
        %v516 = vpop.f32.mrb[0].mxu0
        %517 = vmatprep.mubr.f32.mxu0 0.0
        %518 = vmatmul.mubr.f32.gmra.mrb[0].mxu0 %v388
        %v519 = vpop.f32.mrb[0].mxu0
        %v520 = vadd.f32 %v357, %v519
        %v521 = vpop.f32.mrb[0].mxu0
        %522 = vmatprep.mubr.f32.mxu0 0.0
        %523 = vmatmul.mubr.f32.gmra.mrb[0].mxu0 %v391
        %v524 = vpop.f32.mrb[0].mxu0
        %v525 = vadd.f32 %v357, %v524
        %v526 = vpop.f32.mrb[0].mxu0
        %527 = vmatprep.mubr.f32.mxu0 0.0
        %528 = vmatmul.mubr.f32.gmra.mrb[0].mxu0 %v394
        %v529 = vpop.f32.mrb[0].mxu0
        %v530 = vadd.f32 %v357, %v529
        %v531 = vpop.f32.mrb[0].mxu0
        %532 = vmatprep.mubr.f32.mxu0 0.0
        %533 = vmatmul.mubr.f32.gmra.mrb[0].mxu0 %v397
        %v534 = vpop.f32.mrb[0].mxu0
        %v535 = vadd.f32 %v357, %v534
        %v536 = vpop.f32.mrb[0].mxu0
        %537 = vmatprep.mubr.f32.mxu0 0.0
        %538 = vmatmul.mubr.f32.gmra.mrb[0].mxu0 %v400
        %v539 = vpop.f32.mrb[0].mxu0
        %v540 = vadd.f32 %v357, %v539
        %v541 = vpop.f32.mrb[0].mxu0
        %542 = vmatprep.mubr.f32.mxu0 0.0
        %543 = vmatmul.mubr.f32.gmra.mrb[0].mxu0 %v403
        %v544 = vpop.f32.mrb[0].mxu0
        %v545 = vadd.f32 %v357, %v544
        %v546 = vpop.f32.mrb[0].mxu0
        %547 = vmatprep.mubr.f32.mxu0 0.0
        %548 = vmatmul.mubr.f32.gmra.mrb[0].mxu0 %v406
        %v549 = vpop.f32.mrb[0].mxu0
        %v550 = vadd.f32 %v357, %v549
        %v551 = vpop.f32.mrb[0].mxu0
        %552 = vdwg.mxu0
        %v553 = vmin.f32 %v475, 20.0
        %v554 = vmin.f32 %v480, 20.0
        %v555 = vmin.f32 %v485, 20.0
        %v556 = vmin.f32 %v490, 20.0
        %v557 = vmin.f32 %v495, 20.0
        %v558 = vmin.f32 %v500, 20.0
        %v559 = vmin.f32 %v505, 20.0
        %v560 = vmin.f32 %v510, 20.0
        %v561 = vmin.f32 %v515, 20.0
        %v562 = vmin.f32 %v520, 20.0
        %v563 = vmin.f32 %v525, 20.0
        %v564 = vmin.f32 %v530, 20.0
        %v565 = vmin.f32 %v535, 20.0
        %v566 = vmin.f32 %v540, 20.0
        %v567 = vmin.f32 %v545, 20.0
        %v568 = vmin.f32 %v550, 20.0
        %v569 = vmul.f32 %v553, 1.442695
        %v570 = vpow.pop %v569
        %v571 = vmul.f32 %v554, 1.442695
        %v572 = vpow.pop %v571
        %v573 = vmul.f32 %v555, 1.442695
        %v574 = vpow.pop %v573
        %v575 = vmul.f32 %v556, 1.442695
        %v576 = vpow.pop %v575
        %v577 = vmul.f32 %v557, 1.442695
        %v578 = vpow.pop %v577
        %v579 = vmul.f32 %v558, 1.442695
        %v580 = vpow.pop %v579
        %v581 = vmul.f32 %v559, 1.442695
        %v582 = vpow.pop %v581
        %v583 = vmul.f32 %v560, 1.442695
        %v584 = vpow.pop %v583
        %v585 = vmul.f32 %v561, 1.442695
        %v586 = vpow.pop %v585
        %v587 = vmul.f32 %v562, 1.442695
        %v588 = vpow.pop %v587
        %v589 = vmul.f32 %v563, 1.442695
        %v590 = vpow.pop %v589
        %v591 = vmul.f32 %v564, 1.442695
        %v592 = vpow.pop %v591
        %v593 = vmul.f32 %v565, 1.442695
        %v594 = vpow.pop %v593
        %v595 = vmul.f32 %v566, 1.442695
        %v596 = vpow.pop %v595
        %v597 = vmul.f32 %v567, 1.442695
        %v598 = vpow.pop %v597
        %v599 = vmul.f32 %v568, 1.442695
        %v600 = vpow.pop %v599
        %v601 = vadd.f32 %v570, 2.0
        %v602 = vadd.f32 %v572, 2.0
        %v603 = vadd.f32 %v574, 2.0
        %v604 = vadd.f32 %v576, 2.0
        %v605 = vadd.f32 %v578, 2.0
        %v606 = vadd.f32 %v580, 2.0
        %v607 = vadd.f32 %v582, 2.0
        %v608 = vadd.f32 %v584, 2.0
        %v609 = vadd.f32 %v586, 2.0
        %v610 = vadd.f32 %v588, 2.0
        %v611 = vadd.f32 %v590, 2.0
        %v612 = vadd.f32 %v592, 2.0
        %v613 = vadd.f32 %v594, 2.0
        %v614 = vadd.f32 %v596, 2.0
        %v615 = vadd.f32 %v598, 2.0
        %v616 = vadd.f32 %v600, 2.0
        %v617 = vmul.f32 %v570, %v601
        %v618 = vmul.f32 %v572, %v602
        %v619 = vmul.f32 %v574, %v603
        %v620 = vmul.f32 %v576, %v604
        %v621 = vmul.f32 %v578, %v605
        %v622 = vmul.f32 %v580, %v606
        %v623 = vmul.f32 %v582, %v607
        %v624 = vmul.f32 %v584, %v608
        %v625 = vmul.f32 %v586, %v609
        %v626 = vmul.f32 %v588, %v610
        %v627 = vmul.f32 %v590, %v611
        %v628 = vmul.f32 %v592, %v612
        %v629 = vmul.f32 %v594, %v613
        %v630 = vmul.f32 %v596, %v614
        %v631 = vmul.f32 %v598, %v615
        %v632 = vmul.f32 %v600, %v616
        %v633 = vmul.f32 %v475, %v617
        %v634 = vmul.f32 %v480, %v618
        %v635 = vmul.f32 %v485, %v619
        %v636 = vmul.f32 %v490, %v620
        %v637 = vmul.f32 %v495, %v621
        %v638 = vmul.f32 %v500, %v622
        %v639 = vmul.f32 %v505, %v623
        %v640 = vmul.f32 %v510, %v624
        %v641 = vmul.f32 %v515, %v625
        %v642 = vmul.f32 %v520, %v626
        %v643 = vmul.f32 %v525, %v627
        %v644 = vmul.f32 %v530, %v628
        %v645 = vmul.f32 %v535, %v629
        %v646 = vmul.f32 %v540, %v630
        %v647 = vmul.f32 %v545, %v631
        %v648 = vmul.f32 %v550, %v632
        %v649 = vadd.f32 %v617, 2.0
        %v650 = vadd.f32 %v618, 2.0
        %v651 = vadd.f32 %v619, 2.0
        %v652 = vadd.f32 %v620, 2.0
        %v653 = vadd.f32 %v621, 2.0
        %v654 = vadd.f32 %v622, 2.0
        %v655 = vadd.f32 %v623, 2.0
        %v656 = vadd.f32 %v624, 2.0
        %v657 = vadd.f32 %v625, 2.0
        %v658 = vadd.f32 %v626, 2.0
        %v659 = vadd.f32 %v627, 2.0
        %v660 = vadd.f32 %v628, 2.0
        %v661 = vadd.f32 %v629, 2.0
        %v662 = vadd.f32 %v630, 2.0
        %v663 = vadd.f32 %v631, 2.0
        %v664 = vadd.f32 %v632, 2.0
        %v665 = vrcp.pop %v649
        %v666 = vrcp.pop %v650
        %v667 = vrcp.pop %v651
        %v668 = vrcp.pop %v652
        %v669 = vrcp.pop %v653
        %v670 = vrcp.pop %v654
        %v671 = vrcp.pop %v655
        %v672 = vrcp.pop %v656
        %v673 = vrcp.pop %v657
        %v674 = vrcp.pop %v658
        %v675 = vrcp.pop %v659
        %v676 = vrcp.pop %v660
        %v677 = vrcp.pop %v661
        %v678 = vrcp.pop %v662
        %v679 = vrcp.pop %v663
        %v680 = vrcp.pop %v664
        %v681 = vmul.f32 %v633, %v665
        %v682 = vmul.f32 %v634, %v666
        %v683 = vmul.f32 %v635, %v667
        %v684 = vmul.f32 %v636, %v668
        %v685 = vmul.f32 %v637, %v669
        %v686 = vmul.f32 %v638, %v670
        %v687 = vmul.f32 %v639, %v671
        %v688 = vmul.f32 %v640, %v672
        %v689 = vmul.f32 %v641, %v673
        %v690 = vmul.f32 %v642, %v674
        %v691 = vmul.f32 %v643, %v675
        %v692 = vmul.f32 %v644, %v676
        %v693 = vmul.f32 %v645, %v677
        %v694 = vmul.f32 %v646, %v678
        %v695 = vmul.f32 %v647, %v679
        %v696 = vmul.f32 %v648, %v680
        %vm697 = vcmp.gt.f32.partialorder %v475, 20.0
        %vm698 = vcmp.gt.f32.partialorder %v480, 20.0
        %vm699 = vcmp.gt.f32.partialorder %v485, 20.0
        %vm700 = vcmp.gt.f32.partialorder %v490, 20.0
        %vm701 = vcmp.gt.f32.partialorder %v495, 20.0
        %vm702 = vcmp.gt.f32.partialorder %v500, 20.0
        %vm703 = vcmp.gt.f32.partialorder %v505, 20.0
        %vm704 = vcmp.gt.f32.partialorder %v510, 20.0
        %vm705 = vcmp.gt.f32.partialorder %v515, 20.0
        %vm706 = vcmp.gt.f32.partialorder %v520, 20.0
        %vm707 = vcmp.gt.f32.partialorder %v525, 20.0
        %vm708 = vcmp.gt.f32.partialorder %v530, 20.0
        %vm709 = vcmp.gt.f32.partialorder %v535, 20.0
        %vm710 = vcmp.gt.f32.partialorder %v540, 20.0
        %vm711 = vcmp.gt.f32.partialorder %v545, 20.0
        %vm712 = vcmp.gt.f32.partialorder %v550, 20.0
        %v713 = vsel %vm697, %v475, %v681
        %v714 = vsel %vm698, %v480, %v682
        %v715 = vsel %vm699, %v485, %v683
        %v716 = vsel %vm700, %v490, %v684
        %v717 = vsel %vm701, %v495, %v685
        %v718 = vsel %vm702, %v500, %v686
        %v719 = vsel %vm703, %v505, %v687
        %v720 = vsel %vm704, %v510, %v688
        %v721 = vsel %vm705, %v515, %v689
        %v722 = vsel %vm706, %v520, %v690
        %v723 = vsel %vm707, %v525, %v691
        %v724 = vsel %vm708, %v530, %v692
        %v725 = vsel %vm709, %v535, %v693
        %v726 = vsel %vm710, %v540, %v694
        %v727 = vsel %vm711, %v545, %v695
        %v728 = vsel %vm712, %v550, %v696
        %v729 = vld [vmem:[%s3] sm:$0xff]
        %v730 = vld [vmem:[%s3 + $0x8] sm:$0xff]
        %v731 = vld [vmem:[%s3 + $0x10] sm:$0xff]
        %v732 = vld [vmem:[%s3 + $0x18] sm:$0xff]
        %v733 = vld [vmem:[%s4] sm:$0x1]
        %v735 = vlaneseq
        %v736 = vshrl.u32 %v735, 7
        %v737 = vsub.s32 0, %v736
        %v738 = vrot.slane %v733, %v737
        %vm740 = vcmask 261120
        %v742 = vsel %vm740, %v713, 0
        %v745 = vsel %vm740, %v714, 0
        %v748 = vsel %vm740, %v715, 0
        %v751 = vsel %vm740, %v716, 0
        %v754 = vsel %vm740, %v717, 0
        %v757 = vsel %vm740, %v718, 0
        %v760 = vsel %vm740, %v719, 0
        %v763 = vsel %vm740, %v720, 0
        %v766 = vsel %vm740, %v721, 0
        %v769 = vsel %vm740, %v722, 0
        %v772 = vsel %vm740, %v723, 0
        %v775 = vsel %vm740, %v724, 0
        %v778 = vsel %vm740, %v725, 0
        %v781 = vsel %vm740, %v726, 0
        %v784 = vsel %vm740, %v727, 0
        %v787 = vsel %vm740, %v728, 0
        %789 = vmatprep.subr.mxu0 0.0
        %790 = vmatpush1.msra.mxu0 %v729
        %791 = vmatprep.subr.mxu0 0.0
        %792 = vmatpush1.msra.mxu0 %v730
        %793 = vmatprep.subr.mxu0 0.0
        %794 = vmatpush1.msra.mxu0 %v731
        %795 = vmatprep.subr.mxu0 0.0
        %796 = vmatpush1.msra.mxu0 %v732
        %797 = vmatprep.subr.mxu0 0.0
        %798 = vmatpush1.msra.mxu0 0.0
        %799 = vmatprep.subr.mxu0 0.0
        %800 = vmatpush1.msra.mxu0 0.0
        %801 = vmatprep.subr.mxu0 0.0
        %802 = vmatpush1.msra.mxu0 0.0
        %803 = vmatprep.subr.mxu0 0.0
        %804 = vmatpush1.msra.mxu0 0.0
        %805 = vmatprep.subr.mxu0 0.0
        %806 = vmatpush1.msra.mxu0 0.0
        %807 = vmatprep.subr.mxu0 0.0
        %808 = vmatpush1.msra.mxu0 0.0
        %809 = vmatprep.subr.mxu0 0.0
        %810 = vmatpush1.msra.mxu0 0.0
        %811 = vmatprep.subr.mxu0 0.0
        %812 = vmatpush1.msra.mxu0 0.0
        %813 = vmatprep.subr.mxu0 0.0
        %814 = vmatpush1.msra.mxu0 0.0
        %815 = vmatprep.subr.mxu0 0.0
        %816 = vmatpush1.msra.mxu0 0.0
        %817 = vmatprep.subr.mxu0 0.0
        %818 = vmatpush1.msra.mxu0 0.0
        %819 = vmatprep.subr.mxu0 0.0
        %820 = vmatpush1.msra.mxu0 0.0
        %821 = vmatprep.subr.mxu0 0.0
        %822 = vmatpush1.msra.mxu0 0.0
        %823 = vmatprep.subr.mxu0 0.0
        %824 = vmatpush1.msra.mxu0 0.0
        %825 = vmatprep.subr.mxu0 0.0
        %826 = vmatpush1.msra.mxu0 0.0
        %827 = vmatprep.subr.mxu0 0.0
        %828 = vmatpush1.msra.mxu0 0.0
        %829 = vmatprep.subr.mxu0 0.0
        %830 = vmatpush1.msra.mxu0 0.0
        %831 = vmatprep.subr.mxu0 0.0
        %832 = vmatpush1.msra.mxu0 0.0
        %833 = vmatprep.subr.mxu0 0.0
        %834 = vmatpush1.msra.mxu0 0.0
        %835 = vmatprep.subr.mxu0 0.0
        %836 = vmatpush1.msra.mxu0 0.0
        %837 = vmatprep.subr.mxu0 0.0
        %838 = vmatpush1.msra.mxu0 0.0
        %839 = vmatprep.subr.mxu0 0.0
        %840 = vmatpush1.msra.mxu0 0.0
        %841 = vmatprep.subr.mxu0 0.0
        %842 = vmatpush1.msra.mxu0 0.0
        %843 = vmatprep.subr.mxu0 0.0
        %844 = vmatpush1.msra.mxu0 0.0
        %845 = vmatprep.subr.mxu0 0.0
        %846 = vmatpush1.msra.mxu0 0.0
        %847 = vmatprep.subr.mxu0 0.0
        %848 = vmatpush1.msra.mxu0 0.0
        %849 = vmatprep.subr.mxu0 0.0
        %850 = vmatpush1.msra.mxu0 0.0
        %851 = vmatprep.subr.mxu0 0.0
        %852 = vmatpush1.msra.mxu0 0.0
        %853 = vmatprep.mubr.f32.mxu0 0.0
        %854 = vmatmul.mubr.f32.gmra.mrb[0].mxu0 %v742
        %v855 = vpop.f32.mrb[0].mxu0
        %v856 = vadd.f32 %v738, %v855
        %v857 = vpop.f32.mrb[0].mxu0
        %858 = vmatprep.mubr.f32.mxu0 0.0
        %859 = vmatmul.mubr.f32.gmra.mrb[0].mxu0 %v745
        %v860 = vpop.f32.mrb[0].mxu0
        %v861 = vadd.f32 %v738, %v860
        %v862 = vpop.f32.mrb[0].mxu0
        %863 = vmatprep.mubr.f32.mxu0 0.0
        %864 = vmatmul.mubr.f32.gmra.mrb[0].mxu0 %v748
        %v865 = vpop.f32.mrb[0].mxu0
        %v866 = vadd.f32 %v738, %v865
        %v867 = vpop.f32.mrb[0].mxu0
        %868 = vmatprep.mubr.f32.mxu0 0.0
        %869 = vmatmul.mubr.f32.gmra.mrb[0].mxu0 %v751
        %v870 = vpop.f32.mrb[0].mxu0
        %v871 = vadd.f32 %v738, %v870
        %v872 = vpop.f32.mrb[0].mxu0
        %873 = vmatprep.mubr.f32.mxu0 0.0
        %874 = vmatmul.mubr.f32.gmra.mrb[0].mxu0 %v754
        %v875 = vpop.f32.mrb[0].mxu0
        %v876 = vadd.f32 %v738, %v875
        %v877 = vpop.f32.mrb[0].mxu0
        %878 = vmatprep.mubr.f32.mxu0 0.0
        %879 = vmatmul.mubr.f32.gmra.mrb[0].mxu0 %v757
        %v880 = vpop.f32.mrb[0].mxu0
        %v881 = vadd.f32 %v738, %v880
        %v882 = vpop.f32.mrb[0].mxu0
        %883 = vmatprep.mubr.f32.mxu0 0.0
        %884 = vmatmul.mubr.f32.gmra.mrb[0].mxu0 %v760
        %v885 = vpop.f32.mrb[0].mxu0
        %v886 = vadd.f32 %v738, %v885
        %v887 = vpop.f32.mrb[0].mxu0
        %888 = vmatprep.mubr.f32.mxu0 0.0
        %889 = vmatmul.mubr.f32.gmra.mrb[0].mxu0 %v763
        %v890 = vpop.f32.mrb[0].mxu0
        %v891 = vadd.f32 %v738, %v890
        %v892 = vpop.f32.mrb[0].mxu0
        %893 = vmatprep.mubr.f32.mxu0 0.0
        %894 = vmatmul.mubr.f32.gmra.mrb[0].mxu0 %v766
        %v895 = vpop.f32.mrb[0].mxu0
        %v896 = vadd.f32 %v738, %v895
        %v897 = vpop.f32.mrb[0].mxu0
        %898 = vmatprep.mubr.f32.mxu0 0.0
        %899 = vmatmul.mubr.f32.gmra.mrb[0].mxu0 %v769
        %v900 = vpop.f32.mrb[0].mxu0
        %v901 = vadd.f32 %v738, %v900
        %v902 = vpop.f32.mrb[0].mxu0
        %903 = vmatprep.mubr.f32.mxu0 0.0
        %904 = vmatmul.mubr.f32.gmra.mrb[0].mxu0 %v772
        %v905 = vpop.f32.mrb[0].mxu0
        %v906 = vadd.f32 %v738, %v905
        %v907 = vpop.f32.mrb[0].mxu0
        %908 = vmatprep.mubr.f32.mxu0 0.0
        %909 = vmatmul.mubr.f32.gmra.mrb[0].mxu0 %v775
        %v910 = vpop.f32.mrb[0].mxu0
        %v911 = vadd.f32 %v738, %v910
        %v912 = vpop.f32.mrb[0].mxu0
        %913 = vmatprep.mubr.f32.mxu0 0.0
        %914 = vmatmul.mubr.f32.gmra.mrb[0].mxu0 %v778
        %v915 = vpop.f32.mrb[0].mxu0
        %v916 = vadd.f32 %v738, %v915
        %v917 = vpop.f32.mrb[0].mxu0
        %918 = vmatprep.mubr.f32.mxu0 0.0
        %919 = vmatmul.mubr.f32.gmra.mrb[0].mxu0 %v781
        %v920 = vpop.f32.mrb[0].mxu0
        %v921 = vadd.f32 %v738, %v920
        %v922 = vpop.f32.mrb[0].mxu0
        %923 = vmatprep.mubr.f32.mxu0 0.0
        %924 = vmatmul.mubr.f32.gmra.mrb[0].mxu0 %v784
        %v925 = vpop.f32.mrb[0].mxu0
        %v926 = vadd.f32 %v738, %v925
        %v927 = vpop.f32.mrb[0].mxu0
        %928 = vmatprep.mubr.f32.mxu0 0.0
        %929 = vmatmul.mubr.f32.gmra.mrb[0].mxu0 %v787
        %v930 = vpop.f32.mrb[0].mxu0
        %v931 = vadd.f32 %v738, %v930
        %v932 = vpop.f32.mrb[0].mxu0
        %933 = vdwg.mxu0
        %v934 = vmin.f32 %v856, 20.0
        %v935 = vmin.f32 %v861, 20.0
        %v936 = vmin.f32 %v866, 20.0
        %v937 = vmin.f32 %v871, 20.0
        %v938 = vmin.f32 %v876, 20.0
        %v939 = vmin.f32 %v881, 20.0
        %v940 = vmin.f32 %v886, 20.0
        %v941 = vmin.f32 %v891, 20.0
        %v942 = vmin.f32 %v896, 20.0
        %v943 = vmin.f32 %v901, 20.0
        %v944 = vmin.f32 %v906, 20.0
        %v945 = vmin.f32 %v911, 20.0
        %v946 = vmin.f32 %v916, 20.0
        %v947 = vmin.f32 %v921, 20.0
        %v948 = vmin.f32 %v926, 20.0
        %v949 = vmin.f32 %v931, 20.0
        %v950 = vmul.f32 %v934, 1.442695
        %v951 = vpow.pop %v950
        %v952 = vmul.f32 %v935, 1.442695
        %v953 = vpow.pop %v952
        %v954 = vmul.f32 %v936, 1.442695
        %v955 = vpow.pop %v954
        %v956 = vmul.f32 %v937, 1.442695
        %v957 = vpow.pop %v956
        %v958 = vmul.f32 %v938, 1.442695
        %v959 = vpow.pop %v958
        %v960 = vmul.f32 %v939, 1.442695
        %v961 = vpow.pop %v960
        %v962 = vmul.f32 %v940, 1.442695
        %v963 = vpow.pop %v962
        %v964 = vmul.f32 %v941, 1.442695
        %v965 = vpow.pop %v964
        %v966 = vmul.f32 %v942, 1.442695
        %v967 = vpow.pop %v966
        %v968 = vmul.f32 %v943, 1.442695
        %v969 = vpow.pop %v968
        %v970 = vmul.f32 %v944, 1.442695
        %v971 = vpow.pop %v970
        %v972 = vmul.f32 %v945, 1.442695
        %v973 = vpow.pop %v972
        %v974 = vmul.f32 %v946, 1.442695
        %v975 = vpow.pop %v974
        %v976 = vmul.f32 %v947, 1.442695
        %v977 = vpow.pop %v976
        %v978 = vmul.f32 %v948, 1.442695
        %v979 = vpow.pop %v978
        %v980 = vmul.f32 %v949, 1.442695
        %v981 = vpow.pop %v980
        %v982 = vadd.f32 %v951, 2.0
        %v983 = vadd.f32 %v953, 2.0
        %v984 = vadd.f32 %v955, 2.0
        %v985 = vadd.f32 %v957, 2.0
        %v986 = vadd.f32 %v959, 2.0
        %v987 = vadd.f32 %v961, 2.0
        %v988 = vadd.f32 %v963, 2.0
        %v989 = vadd.f32 %v965, 2.0
        %v990 = vadd.f32 %v967, 2.0
        %v991 = vadd.f32 %v969, 2.0
        %v992 = vadd.f32 %v971, 2.0
        %v993 = vadd.f32 %v973, 2.0
        %v994 = vadd.f32 %v975, 2.0
        %v995 = vadd.f32 %v977, 2.0
        %v996 = vadd.f32 %v979, 2.0
        %v997 = vadd.f32 %v981, 2.0
        %v998 = vmul.f32 %v951, %v982
        %v999 = vmul.f32 %v953, %v983
        %v1000 = vmul.f32 %v955, %v984
        %v1001 = vmul.f32 %v957, %v985
        %v1002 = vmul.f32 %v959, %v986
        %v1003 = vmul.f32 %v961, %v987
        %v1004 = vmul.f32 %v963, %v988
        %v1005 = vmul.f32 %v965, %v989
        %v1006 = vmul.f32 %v967, %v990
        %v1007 = vmul.f32 %v969, %v991
        %v1008 = vmul.f32 %v971, %v992
        %v1009 = vmul.f32 %v973, %v993
        %v1010 = vmul.f32 %v975, %v994
        %v1011 = vmul.f32 %v977, %v995
        %v1012 = vmul.f32 %v979, %v996
        %v1013 = vmul.f32 %v981, %v997
        %v1014 = vmul.f32 %v856, %v998
        %v1015 = vmul.f32 %v861, %v999
        %v1016 = vmul.f32 %v866, %v1000
        %v1017 = vmul.f32 %v871, %v1001
        %v1018 = vmul.f32 %v876, %v1002
        %v1019 = vmul.f32 %v881, %v1003
        %v1020 = vmul.f32 %v886, %v1004
        %v1021 = vmul.f32 %v891, %v1005
        %v1022 = vmul.f32 %v896, %v1006
        %v1023 = vmul.f32 %v901, %v1007
        %v1024 = vmul.f32 %v906, %v1008
        %v1025 = vmul.f32 %v911, %v1009
        %v1026 = vmul.f32 %v916, %v1010
        %v1027 = vmul.f32 %v921, %v1011
        %v1028 = vmul.f32 %v926, %v1012
        %v1029 = vmul.f32 %v931, %v1013
        %v1030 = vadd.f32 %v998, 2.0
        %v1031 = vadd.f32 %v999, 2.0
        %v1032 = vadd.f32 %v1000, 2.0
        %v1033 = vadd.f32 %v1001, 2.0
        %v1034 = vadd.f32 %v1002, 2.0
        %v1035 = vadd.f32 %v1003, 2.0
        %v1036 = vadd.f32 %v1004, 2.0
        %v1037 = vadd.f32 %v1005, 2.0
        %v1038 = vadd.f32 %v1006, 2.0
        %v1039 = vadd.f32 %v1007, 2.0
        %v1040 = vadd.f32 %v1008, 2.0
        %v1041 = vadd.f32 %v1009, 2.0
        %v1042 = vadd.f32 %v1010, 2.0
        %v1043 = vadd.f32 %v1011, 2.0
        %v1044 = vadd.f32 %v1012, 2.0
        %v1045 = vadd.f32 %v1013, 2.0
        %v1046 = vrcp.pop %v1030
        %v1047 = vrcp.pop %v1031
        %v1048 = vrcp.pop %v1032
        %v1049 = vrcp.pop %v1033
        %v1050 = vrcp.pop %v1034
        %v1051 = vrcp.pop %v1035
        %v1052 = vrcp.pop %v1036
        %v1053 = vrcp.pop %v1037
        %v1054 = vrcp.pop %v1038
        %v1055 = vrcp.pop %v1039
        %v1056 = vrcp.pop %v1040
        %v1057 = vrcp.pop %v1041
        %v1058 = vrcp.pop %v1042
        %v1059 = vrcp.pop %v1043
        %v1060 = vrcp.pop %v1044
        %v1061 = vrcp.pop %v1045
        %v1062 = vmul.f32 %v1014, %v1046
        %v1063 = vmul.f32 %v1015, %v1047
        %v1064 = vmul.f32 %v1016, %v1048
        %v1065 = vmul.f32 %v1017, %v1049
        %v1066 = vmul.f32 %v1018, %v1050
        %v1067 = vmul.f32 %v1019, %v1051
        %v1068 = vmul.f32 %v1020, %v1052
        %v1069 = vmul.f32 %v1021, %v1053
        %v1070 = vmul.f32 %v1022, %v1054
        %v1071 = vmul.f32 %v1023, %v1055
        %v1072 = vmul.f32 %v1024, %v1056
        %v1073 = vmul.f32 %v1025, %v1057
        %v1074 = vmul.f32 %v1026, %v1058
        %v1075 = vmul.f32 %v1027, %v1059
        %v1076 = vmul.f32 %v1028, %v1060
        %v1077 = vmul.f32 %v1029, %v1061
        %vm1078 = vcmp.gt.f32.partialorder %v856, 20.0
        %vm1079 = vcmp.gt.f32.partialorder %v861, 20.0
        %vm1080 = vcmp.gt.f32.partialorder %v866, 20.0
        %vm1081 = vcmp.gt.f32.partialorder %v871, 20.0
        %vm1082 = vcmp.gt.f32.partialorder %v876, 20.0
        %vm1083 = vcmp.gt.f32.partialorder %v881, 20.0
        %vm1084 = vcmp.gt.f32.partialorder %v886, 20.0
        %vm1085 = vcmp.gt.f32.partialorder %v891, 20.0
        %vm1086 = vcmp.gt.f32.partialorder %v896, 20.0
        %vm1087 = vcmp.gt.f32.partialorder %v901, 20.0
        %vm1088 = vcmp.gt.f32.partialorder %v906, 20.0
        %vm1089 = vcmp.gt.f32.partialorder %v911, 20.0
        %vm1090 = vcmp.gt.f32.partialorder %v916, 20.0
        %vm1091 = vcmp.gt.f32.partialorder %v921, 20.0
        %vm1092 = vcmp.gt.f32.partialorder %v926, 20.0
        %vm1093 = vcmp.gt.f32.partialorder %v931, 20.0
        %v1094 = vsel %vm1078, %v856, %v1062
        %v1095 = vsel %vm1079, %v861, %v1063
        %v1096 = vsel %vm1080, %v866, %v1064
        %v1097 = vsel %vm1081, %v871, %v1065
        %v1098 = vsel %vm1082, %v876, %v1066
        %v1099 = vsel %vm1083, %v881, %v1067
        %v1100 = vsel %vm1084, %v886, %v1068
        %v1101 = vsel %vm1085, %v891, %v1069
        %v1102 = vsel %vm1086, %v896, %v1070
        %v1103 = vsel %vm1087, %v901, %v1071
        %v1104 = vsel %vm1088, %v906, %v1072
        %v1105 = vsel %vm1089, %v911, %v1073
        %v1106 = vsel %vm1090, %v916, %v1074
        %v1107 = vsel %vm1091, %v921, %v1075
        %v1108 = vsel %vm1092, %v926, %v1076
        %v1109 = vsel %vm1093, %v931, %v1077
        %v1110 = vld [vmem:[%s5] sm:$0xff]
        %v1111 = vld [vmem:[%s5 + $0x8] sm:$0xff]
        %v1112 = vld [vmem:[%s5 + $0x10] sm:$0xff]
        %v1113 = vld [vmem:[%s5 + $0x18] sm:$0xff]
        %v1114 = vld [vmem:[%s6] sm:$0x1]
        %v1116 = vlaneseq
        %v1117 = vshrl.u32 %v1116, 7
        %v1118 = vsub.s32 0, %v1117
        %v1119 = vrot.slane %v1114, %v1118
        %v1122 = vsel %vm740, %v1094, 0
        %v1125 = vsel %vm740, %v1095, 0
        %v1128 = vsel %vm740, %v1096, 0
        %v1131 = vsel %vm740, %v1097, 0
        %v1134 = vsel %vm740, %v1098, 0
        %v1137 = vsel %vm740, %v1099, 0
        %v1140 = vsel %vm740, %v1100, 0
        %v1143 = vsel %vm740, %v1101, 0
        %v1146 = vsel %vm740, %v1102, 0
        %v1149 = vsel %vm740, %v1103, 0
        %v1152 = vsel %vm740, %v1104, 0
        %v1155 = vsel %vm740, %v1105, 0
        %v1158 = vsel %vm740, %v1106, 0
        %v1161 = vsel %vm740, %v1107, 0
        %v1164 = vsel %vm740, %v1108, 0
        %v1167 = vsel %vm740, %v1109, 0
        %1169 = vmatprep.subr.mxu0 0.0
        %1170 = vmatpush1.msra.mxu0 %v1110
        %1171 = vmatprep.subr.mxu0 0.0
        %1172 = vmatpush1.msra.mxu0 %v1111
        %1173 = vmatprep.subr.mxu0 0.0
        %1174 = vmatpush1.msra.mxu0 %v1112
        %1175 = vmatprep.subr.mxu0 0.0
        %1176 = vmatpush1.msra.mxu0 %v1113
        %1177 = vmatprep.subr.mxu0 0.0
        %1178 = vmatpush1.msra.mxu0 0.0
        %1179 = vmatprep.subr.mxu0 0.0
        %1180 = vmatpush1.msra.mxu0 0.0
        %1181 = vmatprep.subr.mxu0 0.0
        %1182 = vmatpush1.msra.mxu0 0.0
        %1183 = vmatprep.subr.mxu0 0.0
        %1184 = vmatpush1.msra.mxu0 0.0
        %1185 = vmatprep.subr.mxu0 0.0
        %1186 = vmatpush1.msra.mxu0 0.0
        %1187 = vmatprep.subr.mxu0 0.0
        %1188 = vmatpush1.msra.mxu0 0.0
        %1189 = vmatprep.subr.mxu0 0.0
        %1190 = vmatpush1.msra.mxu0 0.0
        %1191 = vmatprep.subr.mxu0 0.0
        %1192 = vmatpush1.msra.mxu0 0.0
        %1193 = vmatprep.subr.mxu0 0.0
        %1194 = vmatpush1.msra.mxu0 0.0
        %1195 = vmatprep.subr.mxu0 0.0
        %1196 = vmatpush1.msra.mxu0 0.0
        %1197 = vmatprep.subr.mxu0 0.0
        %1198 = vmatpush1.msra.mxu0 0.0
        %1199 = vmatprep.subr.mxu0 0.0
        %1200 = vmatpush1.msra.mxu0 0.0
        %1201 = vmatprep.subr.mxu0 0.0
        %1202 = vmatpush1.msra.mxu0 0.0
        %1203 = vmatprep.subr.mxu0 0.0
        %1204 = vmatpush1.msra.mxu0 0.0
        %1205 = vmatprep.subr.mxu0 0.0
        %1206 = vmatpush1.msra.mxu0 0.0
        %1207 = vmatprep.subr.mxu0 0.0
        %1208 = vmatpush1.msra.mxu0 0.0
        %1209 = vmatprep.subr.mxu0 0.0
        %1210 = vmatpush1.msra.mxu0 0.0
        %1211 = vmatprep.subr.mxu0 0.0
        %1212 = vmatpush1.msra.mxu0 0.0
        %1213 = vmatprep.subr.mxu0 0.0
        %1214 = vmatpush1.msra.mxu0 0.0
        %1215 = vmatprep.subr.mxu0 0.0
        %1216 = vmatpush1.msra.mxu0 0.0
        %1217 = vmatprep.subr.mxu0 0.0
        %1218 = vmatpush1.msra.mxu0 0.0
        %1219 = vmatprep.subr.mxu0 0.0
        %1220 = vmatpush1.msra.mxu0 0.0
        %1221 = vmatprep.subr.mxu0 0.0
        %1222 = vmatpush1.msra.mxu0 0.0
        %1223 = vmatprep.subr.mxu0 0.0
        %1224 = vmatpush1.msra.mxu0 0.0
        %1225 = vmatprep.subr.mxu0 0.0
        %1226 = vmatpush1.msra.mxu0 0.0
        %1227 = vmatprep.subr.mxu0 0.0
        %1228 = vmatpush1.msra.mxu0 0.0
        %1229 = vmatprep.subr.mxu0 0.0
        %1230 = vmatpush1.msra.mxu0 0.0
        %1231 = vmatprep.subr.mxu0 0.0
        %1232 = vmatpush1.msra.mxu0 0.0
        %1233 = vmatprep.mubr.f32.mxu0 0.0
        %1234 = vmatmul.mubr.f32.gmra.mrb[0].mxu0 %v1122
        %v1235 = vpop.f32.mrb[0].mxu0
        %v1236 = vadd.f32 %v1119, %v1235
        %v1237 = vpop.f32.mrb[0].mxu0
        %1238 = vmatprep.mubr.f32.mxu0 0.0
        %1239 = vmatmul.mubr.f32.gmra.mrb[0].mxu0 %v1125
        %v1240 = vpop.f32.mrb[0].mxu0
        %v1241 = vadd.f32 %v1119, %v1240
        %v1242 = vpop.f32.mrb[0].mxu0
        %1243 = vmatprep.mubr.f32.mxu0 0.0
        %1244 = vmatmul.mubr.f32.gmra.mrb[0].mxu0 %v1128
        %v1245 = vpop.f32.mrb[0].mxu0
        %v1246 = vadd.f32 %v1119, %v1245
        %v1247 = vpop.f32.mrb[0].mxu0
        %1248 = vmatprep.mubr.f32.mxu0 0.0
        %1249 = vmatmul.mubr.f32.gmra.mrb[0].mxu0 %v1131
        %v1250 = vpop.f32.mrb[0].mxu0
        %v1251 = vadd.f32 %v1119, %v1250
        %v1252 = vpop.f32.mrb[0].mxu0
        %1253 = vmatprep.mubr.f32.mxu0 0.0
        %1254 = vmatmul.mubr.f32.gmra.mrb[0].mxu0 %v1134
        %v1255 = vpop.f32.mrb[0].mxu0
        %v1256 = vadd.f32 %v1119, %v1255
        %v1257 = vpop.f32.mrb[0].mxu0
        %1258 = vmatprep.mubr.f32.mxu0 0.0
        %1259 = vmatmul.mubr.f32.gmra.mrb[0].mxu0 %v1137
        %v1260 = vpop.f32.mrb[0].mxu0
        %v1261 = vadd.f32 %v1119, %v1260
        %v1262 = vpop.f32.mrb[0].mxu0
        %1263 = vmatprep.mubr.f32.mxu0 0.0
        %1264 = vmatmul.mubr.f32.gmra.mrb[0].mxu0 %v1140
        %v1265 = vpop.f32.mrb[0].mxu0
        %v1266 = vadd.f32 %v1119, %v1265
        %v1267 = vpop.f32.mrb[0].mxu0
        %1268 = vmatprep.mubr.f32.mxu0 0.0
        %1269 = vmatmul.mubr.f32.gmra.mrb[0].mxu0 %v1143
        %v1270 = vpop.f32.mrb[0].mxu0
        %v1271 = vadd.f32 %v1119, %v1270
        %v1272 = vpop.f32.mrb[0].mxu0
        %1273 = vmatprep.mubr.f32.mxu0 0.0
        %1274 = vmatmul.mubr.f32.gmra.mrb[0].mxu0 %v1146
        %v1275 = vpop.f32.mrb[0].mxu0
        %v1276 = vadd.f32 %v1119, %v1275
        %v1277 = vpop.f32.mrb[0].mxu0
        %1278 = vmatprep.mubr.f32.mxu0 0.0
        %1279 = vmatmul.mubr.f32.gmra.mrb[0].mxu0 %v1149
        %v1280 = vpop.f32.mrb[0].mxu0
        %v1281 = vadd.f32 %v1119, %v1280
        %v1282 = vpop.f32.mrb[0].mxu0
        %1283 = vmatprep.mubr.f32.mxu0 0.0
        %1284 = vmatmul.mubr.f32.gmra.mrb[0].mxu0 %v1152
        %v1285 = vpop.f32.mrb[0].mxu0
        %v1286 = vadd.f32 %v1119, %v1285
        %v1287 = vpop.f32.mrb[0].mxu0
        %1288 = vmatprep.mubr.f32.mxu0 0.0
        %1289 = vmatmul.mubr.f32.gmra.mrb[0].mxu0 %v1155
        %v1290 = vpop.f32.mrb[0].mxu0
        %v1291 = vadd.f32 %v1119, %v1290
        %v1292 = vpop.f32.mrb[0].mxu0
        %1293 = vmatprep.mubr.f32.mxu0 0.0
        %1294 = vmatmul.mubr.f32.gmra.mrb[0].mxu0 %v1158
        %v1295 = vpop.f32.mrb[0].mxu0
        %v1296 = vadd.f32 %v1119, %v1295
        %v1297 = vpop.f32.mrb[0].mxu0
        %1298 = vmatprep.mubr.f32.mxu0 0.0
        %1299 = vmatmul.mubr.f32.gmra.mrb[0].mxu0 %v1161
        %v1300 = vpop.f32.mrb[0].mxu0
        %v1301 = vadd.f32 %v1119, %v1300
        %v1302 = vpop.f32.mrb[0].mxu0
        %1303 = vmatprep.mubr.f32.mxu0 0.0
        %1304 = vmatmul.mubr.f32.gmra.mrb[0].mxu0 %v1164
        %v1305 = vpop.f32.mrb[0].mxu0
        %v1306 = vadd.f32 %v1119, %v1305
        %v1307 = vpop.f32.mrb[0].mxu0
        %1308 = vmatprep.mubr.f32.mxu0 0.0
        %1309 = vmatmul.mubr.f32.gmra.mrb[0].mxu0 %v1167
        %v1310 = vpop.f32.mrb[0].mxu0
        %v1311 = vadd.f32 %v1119, %v1310
        %v1312 = vpop.f32.mrb[0].mxu0
        %1313 = vdwg.mxu0
        %v1314 = vadd.f32 %v1236, %v475
        %v1315 = vadd.f32 %v1241, %v480
        %v1316 = vadd.f32 %v1246, %v485
        %v1317 = vadd.f32 %v1251, %v490
        %v1318 = vadd.f32 %v1256, %v495
        %v1319 = vadd.f32 %v1261, %v500
        %v1320 = vadd.f32 %v1266, %v505
        %v1321 = vadd.f32 %v1271, %v510
        %v1322 = vadd.f32 %v1276, %v515
        %v1323 = vadd.f32 %v1281, %v520
        %v1324 = vadd.f32 %v1286, %v525
        %v1325 = vadd.f32 %v1291, %v530
        %v1326 = vadd.f32 %v1296, %v535
        %v1327 = vadd.f32 %v1301, %v540
        %v1328 = vadd.f32 %v1306, %v545
        %v1329 = vadd.f32 %v1311, %v550
        %v1330 = vld [vmem:[%s7] sm:$0x1]
        %v1331 = vld [vmem:[#allocation2] sm:$0x1]
        %1333 = vset.pattern.permute.xlu0 0
        %1334 = vperm.xlu0 %1333, %v1331
        %v1335 = vpop.permute.xlu0 %1334
        %v1337 = vlaneseq
        %v1338 = vshrl.u32 %v1337, 7
        %v1339 = vsub.s32 0, %v1338
        %v1340 = vrot.slane %v1335, %v1339
        %v1342 = vsel %vm740, %v1330, 0
        %v1345 = vsel %vm740, %v1314, 0
        %v1348 = vsel %vm740, %v1315, 0
        %v1351 = vsel %vm740, %v1316, 0
        %v1354 = vsel %vm740, %v1317, 0
        %v1357 = vsel %vm740, %v1318, 0
        %v1360 = vsel %vm740, %v1319, 0
        %v1363 = vsel %vm740, %v1320, 0
        %v1366 = vsel %vm740, %v1321, 0
        %v1369 = vsel %vm740, %v1322, 0
        %v1372 = vsel %vm740, %v1323, 0
        %v1375 = vsel %vm740, %v1324, 0
        %v1378 = vsel %vm740, %v1325, 0
        %v1381 = vsel %vm740, %v1326, 0
        %v1384 = vsel %vm740, %v1327, 0
        %v1387 = vsel %vm740, %v1328, 0
        %v1390 = vsel %vm740, %v1329, 0
        %1392 = vmatprep.subr.mxu0 0.0
        %1393 = vmatpush1.xpose.msra.mxu0 %v1345
        %1394 = vmatprep.subr.mxu0 0.0
        %1395 = vmatpush1.xpose.msra.mxu0 %v1348
        %1396 = vmatprep.subr.mxu0 0.0
        %1397 = vmatpush1.xpose.msra.mxu0 %v1351
        %1398 = vmatprep.subr.mxu0 0.0
        %1399 = vmatpush1.xpose.msra.mxu0 %v1354
        %1400 = vmatprep.subr.mxu0 0.0
        %1401 = vmatpush1.xpose.msra.mxu0 %v1357
        %1402 = vmatprep.subr.mxu0 0.0
        %1403 = vmatpush1.xpose.msra.mxu0 %v1360
        %1404 = vmatprep.subr.mxu0 0.0
        %1405 = vmatpush1.xpose.msra.mxu0 %v1363
        %1406 = vmatprep.subr.mxu0 0.0
        %1407 = vmatpush1.xpose.msra.mxu0 %v1366
        %1408 = vmatprep.subr.mxu0 0.0
        %1409 = vmatpush1.xpose.msra.mxu0 %v1369
        %1410 = vmatprep.subr.mxu0 0.0
        %1411 = vmatpush1.xpose.msra.mxu0 %v1372
        %1412 = vmatprep.subr.mxu0 0.0
        %1413 = vmatpush1.xpose.msra.mxu0 %v1375
        %1414 = vmatprep.subr.mxu0 0.0
        %1415 = vmatpush1.xpose.msra.mxu0 %v1378
        %1416 = vmatprep.subr.mxu0 0.0
        %1417 = vmatpush1.xpose.msra.mxu0 %v1381
        %1418 = vmatprep.subr.mxu0 0.0
        %1419 = vmatpush1.xpose.msra.mxu0 %v1384
        %1420 = vmatprep.subr.mxu0 0.0
        %1421 = vmatpush1.xpose.msra.mxu0 %v1387
        %1422 = vmatprep.subr.mxu0 0.0
        %1423 = vmatpush1.xpose.msra.mxu0 %v1390
        %1424 = vmatprep.subr.mxu0 0.0
        %1425 = vmatpush1.xpose.msra.mxu0 0.0
        %1426 = vmatprep.subr.mxu0 0.0
        %1427 = vmatpush1.xpose.msra.mxu0 0.0
        %1428 = vmatprep.subr.mxu0 0.0
        %1429 = vmatpush1.xpose.msra.mxu0 0.0
        %1430 = vmatprep.subr.mxu0 0.0
        %1431 = vmatpush1.xpose.msra.mxu0 0.0
        %1432 = vmatprep.subr.mxu0 0.0
        %1433 = vmatpush1.xpose.msra.mxu0 0.0
        %1434 = vmatprep.subr.mxu0 0.0
        %1435 = vmatpush1.xpose.msra.mxu0 0.0
        %1436 = vmatprep.subr.mxu0 0.0
        %1437 = vmatpush1.xpose.msra.mxu0 0.0
        %1438 = vmatprep.subr.mxu0 0.0
        %1439 = vmatpush1.xpose.msra.mxu0 0.0
        %1440 = vmatprep.subr.mxu0 0.0
        %1441 = vmatpush1.xpose.msra.mxu0 0.0
        %1442 = vmatprep.subr.mxu0 0.0
        %1443 = vmatpush1.xpose.msra.mxu0 0.0
        %1444 = vmatprep.subr.mxu0 0.0
        %1445 = vmatpush1.xpose.msra.mxu0 0.0
        %1446 = vmatprep.subr.mxu0 0.0
        %1447 = vmatpush1.xpose.msra.mxu0 0.0
        %1448 = vmatprep.subr.mxu0 0.0
        %1449 = vmatpush1.xpose.msra.mxu0 0.0
        %1450 = vmatprep.subr.mxu0 0.0
        %1451 = vmatpush1.xpose.msra.mxu0 0.0
        %1452 = vmatprep.subr.mxu0 0.0
        %1453 = vmatpush1.xpose.msra.mxu0 0.0
        %1454 = vmatprep.subr.mxu0 0.0
        %1455 = vmatpush1.xpose.msra.mxu0 0.0
        %1456 = vmatprep.mubr.f32.mxu0 0.0
        %1457 = vmatmul.mubr.f32.gmra.mrb[0].mxu0 %v1342
        %v1458 = vpop.f32.mrb[0].mxu0
        %v1459 = vadd.f32 %v1340, %v1458
        %v1460 = vpop.f32.mrb[0].mxu0
        %1461 = vdwg.mxu0
        %1462 = vst [vmem:[%s327] sm:$0x1] %v1459
        %s1463 = sand.u32 %s227, 1
        %s1464 = scalar_lea.sflag [#allocation4], %s1463
        %s1465 = sand.u32 %s227, 1
        %s1466 = scalar_lea.vmem [#allocation3], %s1465
        // Predicated region
        $region57: #{tpu_custom_call.1} parent=55 // pred_check
          %p1467 = pneg %p237
        $region58: #{tpu_custom_call.1} parent=55 // pred_check_branch
          %1469 = sbr.rel (%p1467) target = $region60
        $region59: #{tpu_custom_call.1} parent=55 // pred_region
          %s1471 = ssub.s32 16, 16
          %1472 = vsyncadd %s1464, %s1471
          %s1473 = smul.addr %s25, 16
          %s1474 = scalar_lea.hbm %s9, %s1473
          %s1476 = sshll.u32 %s1466, 4
          %s1477 = int_to_ptr.vmem [resolvable:$true] %s1476
          %1479 = dma.vmem_to_hbm [thread:$0]  %s1477, 16, %s1474, %s1464
        $region60: #{tpu_custom_call.1} parent=55 // pred_fallthru
          _
      $region56: #{tpu_custom_call.1} parent=5 // pred_fallthru
        _
      %p1480 = scmp.le.s32.totalorder 2, %s20
      // Predicated region
      $region61: #{tpu_custom_call.1} parent=5 // pred_check
        %p1481 = pneg %p1480
      $region62: #{tpu_custom_call.1} parent=5 // pred_check_branch
        %1483 = sbr.rel (%p1481) target = $region64
      $region63: #{tpu_custom_call.1} parent=5 // pred_region
        %s1484 = ssub.s32 %s20, 2
        // Predicated region
        $region65: #{tpu_custom_call.1} parent=63 // pred_check
          %p1485 = pneg %p243
        $region66: #{tpu_custom_call.1} parent=63 // pred_check_branch
          %1487 = sbr.rel (%p1485) target = $region68
        $region67: #{tpu_custom_call.1} parent=63 // pred_region
          %s1488 = sand.u32 %s228, 1
          %s1489 = scalar_lea.sflag [#allocation4], %s1488
          %s1490 = sand.u32 %s228, 1
          %s1491 = scalar_lea.vmem [#allocation3], %s1490
          %1492 = dma.done %s1489, 16
        $region68: #{tpu_custom_call.1} parent=63 // pred_fallthru
          _
      $region64: #{tpu_custom_call.1} parent=5 // pred_fallthru
        _
    $region6: #{tpu_custom_call.1} parent=1 // loop_footer
      %s24 = sadd.s32 1, %s20
    $region7: #{tpu_custom_call.1} parent=1 // loop_footer_branch
      %19 = sbr.rel target = $region3
    $region8: #{tpu_custom_call.1} parent=1 // loop_exit
      _
    %1493 = vsyncpa [#allocation4], 1
    %s1494 = scalar_lea.sflag [#allocation4], 1
    %1495 = vsyncpa %s1494, 1

</llo_original>
